<compile_context>
chip_gen: v7x
topology: tpu7x:2x2x1
jax: 0.10.0
libtpu: 0.0.40
codegen_flags: <defaults>
</compile_context>

<pallas_src>
import functools

import jax
import jax.numpy as jnp
from jax import lax
from jax.experimental import pallas as pl
from jax.experimental.pallas import tpu as pltpu

TB = 16  # forward passes (graphs) processed per grid step


# ----------------------------- Pallas kernel -------------------------------

def gcn_batched_kernel(x_ref, a_ref, convw_ref, wl1_ref, misc_ref, o_ref):
    """One grid step = TB independent GCN forward passes.

    x:     (1, N, F*TB)  f32   TB graphs' features, lane-packed (col = f*TB+t)
    a:     (N, N)        f32   normalized adjacency A_hat (VMEM-resident)
    convw: (F*TB + 2F*TB, 2F*TB) f32   [kron(W1,I_TB); kron(W2,I_TB)]
    wl1:   (2F, N, D/2)  bf16  lin1 weight regrouped: wl1[g,n,:] = L1[n*2F+g,:]
    misc:  (8+O, MW)     f32   rows 0..3: b1_exp, b2_exp, bl1, bl3;
                               rows 8..8+O: lin3_w^T (O, D/2)
    o:     (TB, O)       f32   softmax probabilities per graph
    """
    tb, out_dim = o_ref.shape
    two_f, _, d_half = wl1_ref.shape
    f_tb = x_ref.shape[2]
    g_tb = two_f * tb

    a = a_ref[...]                                       # (N, N)
    x = x_ref[0]                                         # (N, F*TB)

    w1k = convw_ref[0:f_tb, 0:g_tb]                      # (F*TB, 2F*TB)
    w2k = convw_ref[f_tb:f_tb + g_tb, 0:g_tb]            # (2F*TB, 2F*TB)
    b1 = misc_ref[0:1, 0:g_tb]
    b2 = misc_ref[1:2, 0:g_tb]
    bl1 = misc_ref[2:3, 0:d_half]
    bl3 = misc_ref[3:4, 0:out_dim]
    wl3_t = misc_ref[8:8 + out_dim, 0:d_half]            # (O, D/2), f32

    # conv1: A_hat @ (x @ W1) + b1, ReLU  — all items at once (lane-packed).
    xw = jnp.dot(x, w1k, preferred_element_type=jnp.float32)           # MXU
    h = jnp.dot(a, xw, preferred_element_type=jnp.float32) + b1        # MXU
    h = jnp.maximum(h, 0.0)

    # conv2: A_hat @ (h @ W2) + b2
    hw = jnp.dot(h, w2k, preferred_element_type=jnp.float32)           # MXU
    h2 = jnp.dot(a, hw, preferred_element_type=jnp.float32) + b2       # (N, 2F*TB)

    # lin1 on the per-item flatten hidden[t,o] = sum_{n,g} h2[n,g*TB+t]*L1[n*2F+g,o].
    # 8 accumulated bf16 MXU dots (contraction over N), batch fills the rows;
    # the bf16 weight is consumed directly (no in-kernel f32 cast).
    acc = jnp.zeros((tb, d_half), jnp.float32)
    for g in range(two_f):                                # static unroll, 2F = 8
        h_g = h2[:, g * tb:(g + 1) * tb].astype(jnp.bfloat16)          # (N, TB)
        acc = acc + lax.dot_general(
            h_g, wl1_ref[g],
            dimension_numbers=(((0,), (0,)), ((), ())),   # contract node dim
            preferred_element_type=jnp.float32)                         # (TB, D/2)
    hidden = jnp.maximum(acc + bl1, 0.0)

    # lin3 (f32 weight, stored transposed) + softmax(dim=-1)
    logits = lax.dot_general(
        hidden, wl3_t, dimension_numbers=(((1,), (1,)), ((), ())),
        preferred_element_type=jnp.float32) + bl3                        # (TB, O)
    m = jnp.max(logits, axis=-1, keepdims=True)
    e = jnp.exp(logits - m)
    s = jnp.sum(e, axis=-1, keepdims=True)
    o_ref[...] = e / s            # exact reciprocal: probabilities sum to 1


# ------------------------------- JAX glue -----------------------------------

def normalized_adjacency(edge_index, num_nodes):
    """Dense A_hat = D^{-1/2}(A+I)D^{-1/2}, matching PyG GCNConv defaults.
    Uses an XLA dense scatter; call ONCE per graph and reuse."""
    src = edge_index[0]
    dst = edge_index[1]
    loop = jnp.arange(num_nodes, dtype=edge_index.dtype)
    src = jnp.concatenate([src, loop])
    dst = jnp.concatenate([dst, loop])
    A = jnp.zeros((num_nodes, num_nodes), jnp.float32).at[dst, src].add(1.0)
    deg = jnp.sum(A, axis=1)
    dinv = 1.0 / jnp.sqrt(jnp.maximum(deg, 1e-12))
    return dinv[:, None] * A * dinv[None, :]


def prepare_inference_params(params, num_nodes, input_dim, output_dim, tb=TB):
    """One-time repacking (per checkpoint, outside the hot path):
      * conv weights kron'd with I_TB so the lane-packed batch goes through
        plain 2D MXU matmuls; both stacked into one buffer,
      * conv biases lane-expanded; all biases + lin3_w^T packed into one
        small f32 buffer (fewer DMA descriptors, no per-bias tile padding),
      * lin1 weight regrouped to (2F, N, D/2) and stored bf16 (halves the
        dominant HBM/VMEM stream; MXU consumes bf16 natively),
      * lin3 weight stays f32 (tiny; bf16 would only cost accuracy).
    """
    two_f = 2 * input_dim
    d_half = num_nodes * two_f // 2
    g_tb = two_f * tb
    eye = jnp.eye(tb, dtype=jnp.float32)

    convw = jnp.concatenate(
        [jnp.kron(params["conv1_w"], eye),        # (F*TB, 2F*TB)
         jnp.kron(params["conv2_w"], eye)],       # (2F*TB, 2F*TB)
        axis=0)

    mw = max(g_tb, d_half, output_dim)
    mw = -(-mw // 128) * 128
    misc = jnp.zeros((8 + output_dim, mw), jnp.float32)
    misc = misc.at[0, :g_tb].set(jnp.repeat(params["conv1_b"].reshape(-1), tb))
    misc = misc.at[1, :g_tb].set(jnp.repeat(params["conv2_b"].reshape(-1), tb))
    misc = misc.at[2, :d_half].set(params["lin1_b"].reshape(-1))
    misc = misc.at[3, :output_dim].set(params["lin3_b"].reshape(-1))
    misc = misc.at[8:8 + output_dim, :d_half].set(params["lin3_w"].T)

    wl1 = (params["lin1_w"]
           .reshape(num_nodes, two_f, d_half)
           .transpose(1, 0, 2)                    # wl1[g, n, :] = L1[n*2F+g, :]
           .astype(jnp.bfloat16))
    return {"convw": convw, "misc": misc, "lin1_w": wl1}


@functools.partial(jax.jit, static_argnames=("output_dim",))
def gcn_forward(prep, x, a_hat, *, output_dim):
    """Batched forward: x is (B, N, F); returns (B, output_dim) softmax rows.
    One pallas_call; grid over batch blocks of TB with weights VMEM-resident."""
    b, n, f = x.shape
    tb = TB
    b_pad = -(-b // tb) * tb
    if b_pad != b:
        x = jnp.concatenate([x, jnp.zeros((b_pad - b, n, f), x.dtype)], axis=0)
    nblk = b_pad // tb

    # Layout plumbing (not compute): pack TB graphs into the lane dim,
    # feature-major (column = f*TB + t).
    x_pack = (x.reshape(nblk, tb, n, f)
               .transpose(0, 2, 3, 1)
               .reshape(nblk, n, f * tb))

    two_f, _, d_half = prep["lin1_w"].shape
    convw = prep["convw"]
    misc = prep["misc"]

    out = pl.pallas_call(
        gcn_batched_kernel,
        out_shape=jax.ShapeDtypeStruct((b_pad, output_dim), jnp.float32),
        grid=(nblk,),
        in_specs=[
            pl.BlockSpec((1, n, f * tb), lambda i: (i, 0, 0)),        # x streams
            pl.BlockSpec((n, n), lambda i: (0, 0)),                   # A_hat resident
            pl.BlockSpec(convw.shape, lambda i: (0, 0)),              # conv weights resident
            pl.BlockSpec((two_f, n, d_half), lambda i: (0, 0, 0)),    # lin1 bf16 resident
            pl.BlockSpec(misc.shape, lambda i: (0, 0)),               # biases + lin3^T resident
        ],
        out_specs=pl.BlockSpec((tb, output_dim), lambda i: (i, 0)),
        compiler_params=pltpu.CompilerParams(
            dimension_semantics=("parallel",)),                       # v7x: 2 TCs
    )(x_pack, a_hat, convw, prep["lin1_w"], misc)
    return out[:b]


def init_params(key, input_dim, num_nodes, output_dim):
    d = num_nodes * input_dim * 2
    keys = jax.random.split(key, 8)
    scale = 0.1
    return {
        # GCNConv weights stored as (in, out)
        "conv1_w": scale * jax.random.normal(keys[0], (input_dim, 2 * input_dim), jnp.float32),
        "conv1_b": scale * jax.random.normal(keys[1], (1, 2 * input_dim), jnp.float32),
        "conv2_w": scale * jax.random.normal(keys[2], (2 * input_dim, 2 * input_dim), jnp.float32),
        "conv2_b": scale * jax.random.normal(keys[3], (1, 2 * input_dim), jnp.float32),
        # nn.Linear weight is (out, in); stored pre-transposed as (in, out)
        "lin1_w": scale * jax.random.normal(keys[4], (d, d // 2), jnp.float32),
        "lin1_b": scale * jax.random.normal(keys[5], (1, d // 2), jnp.float32),
        "lin3_w": scale * jax.random.normal(keys[6], (d // 2, output_dim), jnp.float32),
        "lin3_b": scale * jax.random.normal(keys[7], (1, output_dim), jnp.float32),
    }


def reference_forward(params, x, a_hat):
    """Plain-JAX batched reference. The lin1 path is routed through bf16
    (weight and activation) to match the kernel's quantization; everything
    else is f32, so remaining deltas are accumulation-order only."""
    l1w = params["lin1_w"].astype(jnp.bfloat16).astype(jnp.float32)

    def single(xi):
        h = jnp.maximum(a_hat @ (xi @ params["conv1_w"]) + params["conv1_b"], 0.0)
        h = a_hat @ (h @ params["conv2_w"]) + params["conv2_b"]
        flat = h.reshape(1, -1).astype(jnp.bfloat16).astype(jnp.float32)
        hid = jnp.maximum(flat @ l1w + params["lin1_b"], 0.0)
        logits = hid @ params["lin3_w"] + params["lin3_b"]
        return jax.nn.softmax(logits, axis=-1).reshape(-1)

    return jax.vmap(single)(x)


if __name__ == "__main__":
    num_nodes = 57           # module default
    input_dim = 4
    output_dim = 8
    batch = 24               # not a multiple of TB on purpose (exercises padding)

    key = jax.random.PRNGKey(0)
    k_x, k_p = jax.random.split(key)

    # batch of node-feature matrices (batch, num_nodes, input_dim)
    x = jax.random.normal(k_x, (batch, num_nodes, input_dim), jnp.float32)

    # deterministic ring graph (undirected), shape (2, 2*N)
    nodes = jnp.arange(num_nodes, dtype=jnp.int32)
    nxt = (nodes + 1) % num_nodes
    edge_index = jnp.stack([
        jnp.concatenate([nodes, nxt]),
        jnp.concatenate([nxt, nodes]),
    ], axis=0)

    params = init_params(k_p, input_dim, num_nodes, output_dim)

    # Hoisted out of the hot path: adjacency scatter + weight repack happen
    # once per graph / per checkpoint, not per forward.
    a_hat = jax.block_until_ready(normalized_adjacency(edge_index, num_nodes))
    prep = jax.tree_util.tree_map(
        jax.block_until_ready,
        prepare_inference_params(params, num_nodes, input_dim, output_dim))

    out = gcn_forward(prep, x, a_hat, output_dim=output_dim)
    out = jax.block_until_ready(out)

    ref = reference_forward(params, x, a_hat)
    assert out.shape == (batch, output_dim)
    assert jnp.allclose(jnp.sum(out, axis=-1), 1.0, atol=1e-4)
    # bf16 lin1 path (matched in the reference) + MXU accumulation order.
    assert jnp.allclose(out, ref, atol=5e-3, rtol=1e-2)

    print("KERNEL_OK")
</pallas_src>

<mosaic_0001>
module attributes {stable_mosaic.version = 11 : i64} {
  func.func @gcn_batched_kernel(%arg0: i32, %arg1: memref<1x57x64xf32, #tpu.memory_space<vmem>>, %arg2: memref<57x57xf32, #tpu.memory_space<vmem>>, %arg3: memref<192x128xf32, #tpu.memory_space<vmem>>, %arg4: memref<8x57x228xbf16, #tpu.memory_space<vmem>>, %arg5: memref<16x256xf32, #tpu.memory_space<vmem>>, %arg6: memref<16x8xf32, #tpu.memory_space<vmem>>) attributes {dimension_semantics = [#tpu.dimension_semantics<parallel>], iteration_bounds = array<i64: 2>, scalar_prefetch = 0 : i64, scratch_operands = 0 : i64, tpu.core_type = #tpu.core_type<tc>, window_params = [{transform_indices = @transform_0, window_bounds = array<i64: 1, 57, 64>}, {pipeline_mode = #tpu.pipeline_mode<synchronous>, transform_indices = @transform_1, window_bounds = array<i64: 57, 57>}, {pipeline_mode = #tpu.pipeline_mode<synchronous>, transform_indices = @transform_2, window_bounds = array<i64: 192, 128>}, {pipeline_mode = #tpu.pipeline_mode<synchronous>, transform_indices = @transform_3, window_bounds = array<i64: 8, 57, 228>}, {pipeline_mode = #tpu.pipeline_mode<synchronous>, transform_indices = @transform_4, window_bounds = array<i64: 16, 256>}, {transform_indices = @transform_5, window_bounds = array<i64: 16, 8>}]} {
    %c0 = arith.constant 0 : index
    %c0_0 = arith.constant 0 : index
    %0 = vector.load %arg2[%c0, %c0_0] : memref<57x57xf32, #tpu.memory_space<vmem>>, vector<57x57xf32>
    %c0_1 = arith.constant 0 : index
    %c0_2 = arith.constant 0 : index
    %c0_3 = arith.constant 0 : index
    %1 = vector.load %arg1[%c0_1, %c0_2, %c0_3] : memref<1x57x64xf32, #tpu.memory_space<vmem>>, vector<1x57x64xf32>
    %2 = vector.shape_cast %1 : vector<1x57x64xf32> to vector<57x64xf32>
    %c0_4 = arith.constant 0 : index
    %c0_5 = arith.constant 0 : index
    %3 = vector.load %arg3[%c0_4, %c0_5] : memref<192x128xf32, #tpu.memory_space<vmem>>, vector<64x128xf32>
    %c64 = arith.constant 64 : index
    %c0_6 = arith.constant 0 : index
    %4 = vector.load %arg3[%c64, %c0_6] : memref<192x128xf32, #tpu.memory_space<vmem>>, vector<128x128xf32>
    %c0_7 = arith.constant 0 : index
    %c0_8 = arith.constant 0 : index
    %5 = vector.load %arg5[%c0_7, %c0_8] : memref<16x256xf32, #tpu.memory_space<vmem>>, vector<1x128xf32>
    %c1 = arith.constant 1 : index
    %c0_9 = arith.constant 0 : index
    %6 = vector.load %arg5[%c1, %c0_9] : memref<16x256xf32, #tpu.memory_space<vmem>>, vector<1x128xf32>
    %c2 = arith.constant 2 : index
    %c0_10 = arith.constant 0 : index
    %7 = vector.load %arg5[%c2, %c0_10] : memref<16x256xf32, #tpu.memory_space<vmem>>, vector<1x228xf32>
    %c3 = arith.constant 3 : index
    %c0_11 = arith.constant 0 : index
    %8 = vector.load %arg5[%c3, %c0_11] : memref<16x256xf32, #tpu.memory_space<vmem>>, vector<1x8xf32>
    %c8 = arith.constant 8 : index
    %c0_12 = arith.constant 0 : index
    %9 = vector.load %arg5[%c8, %c0_12] : memref<16x256xf32, #tpu.memory_space<vmem>>, vector<8x228xf32>
    %cst = arith.constant dense<0.000000e+00> : vector<57x128xf32>
    %10 = tpu.matmul %2, %3, %cst {dimension_numbers = #tpu.dot_dimension_numbers<[1], [0], [0], [1], [0, 0, 1, 1], [], []>} : vector<57x64xf32>, vector<64x128xf32>, vector<57x128xf32> -> vector<57x128xf32>
    %cst_13 = arith.constant dense<0.000000e+00> : vector<57x128xf32>
    %11 = tpu.matmul %0, %10, %cst_13 {dimension_numbers = #tpu.dot_dimension_numbers<[1], [0], [0], [1], [0, 0, 1, 1], [], []>} : vector<57x57xf32>, vector<57x128xf32>, vector<57x128xf32> -> vector<57x128xf32>
    %12 = vector.broadcast %5 : vector<1x128xf32> to vector<57x128xf32>
    %13 = arith.addf %11, %12 : vector<57x128xf32>
    %cst_14 = arith.constant 0.000000e+00 : f32
    %14 = vector.broadcast %cst_14 : f32 to vector<57x128xf32>
    %15 = arith.maximumf %13, %14 : vector<57x128xf32>
    %cst_15 = arith.constant dense<0.000000e+00> : vector<57x128xf32>
    %16 = tpu.matmul %15, %4, %cst_15 {dimension_numbers = #tpu.dot_dimension_numbers<[1], [0], [0], [1], [0, 0, 1, 1], [], []>} : vector<57x128xf32>, vector<128x128xf32>, vector<57x128xf32> -> vector<57x128xf32>
    %cst_16 = arith.constant dense<0.000000e+00> : vector<57x128xf32>
    %17 = tpu.matmul %0, %16, %cst_16 {dimension_numbers = #tpu.dot_dimension_numbers<[1], [0], [0], [1], [0, 0, 1, 1], [], []>} : vector<57x57xf32>, vector<57x128xf32>, vector<57x128xf32> -> vector<57x128xf32>
    %18 = vector.broadcast %6 : vector<1x128xf32> to vector<57x128xf32>
    %19 = arith.addf %17, %18 : vector<57x128xf32>
    %cst_17 = arith.constant 0.000000e+00 : f32
    %20 = vector.broadcast %cst_17 : f32 to vector<16x228xf32>
    %21 = vector.extract_strided_slice %19 {offsets = [0, 0], sizes = [57, 16], strides = [1, 1]} : vector<57x128xf32> to vector<57x16xf32>
    %22 = arith.truncf %21 : vector<57x16xf32> to vector<57x16xbf16>
    %c0_18 = arith.constant 0 : index
    %c0_19 = arith.constant 0 : index
    %c0_20 = arith.constant 0 : index
    %23 = vector.load %arg4[%c0_18, %c0_19, %c0_20] : memref<8x57x228xbf16, #tpu.memory_space<vmem>>, vector<1x57x228xbf16>
    %24 = vector.shape_cast %23 : vector<1x57x228xbf16> to vector<57x228xbf16>
    %cst_21 = arith.constant dense<0.000000e+00> : vector<16x228xf32>
    %25 = tpu.matmul %22, %24, %cst_21 {dimension_numbers = #tpu.dot_dimension_numbers<[0], [0], [1], [1], [0, 1, 1, 1], [], []>} : vector<57x16xbf16>, vector<57x228xbf16>, vector<16x228xf32> -> vector<16x228xf32>
    %26 = arith.addf %20, %25 : vector<16x228xf32>
    %27 = vector.extract_strided_slice %19 {offsets = [0, 16], sizes = [57, 16], strides = [1, 1]} : vector<57x128xf32> to vector<57x16xf32>
    %28 = arith.truncf %27 : vector<57x16xf32> to vector<57x16xbf16>
    %c1_22 = arith.constant 1 : index
    %c0_23 = arith.constant 0 : index
    %c0_24 = arith.constant 0 : index
    %29 = vector.load %arg4[%c1_22, %c0_23, %c0_24] : memref<8x57x228xbf16, #tpu.memory_space<vmem>>, vector<1x57x228xbf16>
    %30 = vector.shape_cast %29 : vector<1x57x228xbf16> to vector<57x228xbf16>
    %cst_25 = arith.constant dense<0.000000e+00> : vector<16x228xf32>
    %31 = tpu.matmul %28, %30, %cst_25 {dimension_numbers = #tpu.dot_dimension_numbers<[0], [0], [1], [1], [0, 1, 1, 1], [], []>} : vector<57x16xbf16>, vector<57x228xbf16>, vector<16x228xf32> -> vector<16x228xf32>
    %32 = arith.addf %26, %31 : vector<16x228xf32>
    %33 = vector.extract_strided_slice %19 {offsets = [0, 32], sizes = [57, 16], strides = [1, 1]} : vector<57x128xf32> to vector<57x16xf32>
    %34 = arith.truncf %33 : vector<57x16xf32> to vector<57x16xbf16>
    %c2_26 = arith.constant 2 : index
    %c0_27 = arith.constant 0 : index
    %c0_28 = arith.constant 0 : index
    %35 = vector.load %arg4[%c2_26, %c0_27, %c0_28] : memref<8x57x228xbf16, #tpu.memory_space<vmem>>, vector<1x57x228xbf16>
    %36 = vector.shape_cast %35 : vector<1x57x228xbf16> to vector<57x228xbf16>
    %cst_29 = arith.constant dense<0.000000e+00> : vector<16x228xf32>
    %37 = tpu.matmul %34, %36, %cst_29 {dimension_numbers = #tpu.dot_dimension_numbers<[0], [0], [1], [1], [0, 1, 1, 1], [], []>} : vector<57x16xbf16>, vector<57x228xbf16>, vector<16x228xf32> -> vector<16x228xf32>
    %38 = arith.addf %32, %37 : vector<16x228xf32>
    %39 = vector.extract_strided_slice %19 {offsets = [0, 48], sizes = [57, 16], strides = [1, 1]} : vector<57x128xf32> to vector<57x16xf32>
    %40 = arith.truncf %39 : vector<57x16xf32> to vector<57x16xbf16>
    %c3_30 = arith.constant 3 : index
    %c0_31 = arith.constant 0 : index
    %c0_32 = arith.constant 0 : index
    %41 = vector.load %arg4[%c3_30, %c0_31, %c0_32] : memref<8x57x228xbf16, #tpu.memory_space<vmem>>, vector<1x57x228xbf16>
    %42 = vector.shape_cast %41 : vector<1x57x228xbf16> to vector<57x228xbf16>
    %cst_33 = arith.constant dense<0.000000e+00> : vector<16x228xf32>
    %43 = tpu.matmul %40, %42, %cst_33 {dimension_numbers = #tpu.dot_dimension_numbers<[0], [0], [1], [1], [0, 1, 1, 1], [], []>} : vector<57x16xbf16>, vector<57x228xbf16>, vector<16x228xf32> -> vector<16x228xf32>
    %44 = arith.addf %38, %43 : vector<16x228xf32>
    %45 = vector.extract_strided_slice %19 {offsets = [0, 64], sizes = [57, 16], strides = [1, 1]} : vector<57x128xf32> to vector<57x16xf32>
    %46 = arith.truncf %45 : vector<57x16xf32> to vector<57x16xbf16>
    %c4 = arith.constant 4 : index
    %c0_34 = arith.constant 0 : index
    %c0_35 = arith.constant 0 : index
    %47 = vector.load %arg4[%c4, %c0_34, %c0_35] : memref<8x57x228xbf16, #tpu.memory_space<vmem>>, vector<1x57x228xbf16>
    %48 = vector.shape_cast %47 : vector<1x57x228xbf16> to vector<57x228xbf16>
    %cst_36 = arith.constant dense<0.000000e+00> : vector<16x228xf32>
    %49 = tpu.matmul %46, %48, %cst_36 {dimension_numbers = #tpu.dot_dimension_numbers<[0], [0], [1], [1], [0, 1, 1, 1], [], []>} : vector<57x16xbf16>, vector<57x228xbf16>, vector<16x228xf32> -> vector<16x228xf32>
    %50 = arith.addf %44, %49 : vector<16x228xf32>
    %51 = vector.extract_strided_slice %19 {offsets = [0, 80], sizes = [57, 16], strides = [1, 1]} : vector<57x128xf32> to vector<57x16xf32>
    %52 = arith.truncf %51 : vector<57x16xf32> to vector<57x16xbf16>
    %c5 = arith.constant 5 : index
    %c0_37 = arith.constant 0 : index
    %c0_38 = arith.constant 0 : index
    %53 = vector.load %arg4[%c5, %c0_37, %c0_38] : memref<8x57x228xbf16, #tpu.memory_space<vmem>>, vector<1x57x228xbf16>
    %54 = vector.shape_cast %53 : vector<1x57x228xbf16> to vector<57x228xbf16>
    %cst_39 = arith.constant dense<0.000000e+00> : vector<16x228xf32>
    %55 = tpu.matmul %52, %54, %cst_39 {dimension_numbers = #tpu.dot_dimension_numbers<[0], [0], [1], [1], [0, 1, 1, 1], [], []>} : vector<57x16xbf16>, vector<57x228xbf16>, vector<16x228xf32> -> vector<16x228xf32>
    %56 = arith.addf %50, %55 : vector<16x228xf32>
    %57 = vector.extract_strided_slice %19 {offsets = [0, 96], sizes = [57, 16], strides = [1, 1]} : vector<57x128xf32> to vector<57x16xf32>
    %58 = arith.truncf %57 : vector<57x16xf32> to vector<57x16xbf16>
    %c6 = arith.constant 6 : index
    %c0_40 = arith.constant 0 : index
    %c0_41 = arith.constant 0 : index
    %59 = vector.load %arg4[%c6, %c0_40, %c0_41] : memref<8x57x228xbf16, #tpu.memory_space<vmem>>, vector<1x57x228xbf16>
    %60 = vector.shape_cast %59 : vector<1x57x228xbf16> to vector<57x228xbf16>
    %cst_42 = arith.constant dense<0.000000e+00> : vector<16x228xf32>
    %61 = tpu.matmul %58, %60, %cst_42 {dimension_numbers = #tpu.dot_dimension_numbers<[0], [0], [1], [1], [0, 1, 1, 1], [], []>} : vector<57x16xbf16>, vector<57x228xbf16>, vector<16x228xf32> -> vector<16x228xf32>
    %62 = arith.addf %56, %61 : vector<16x228xf32>
    %63 = vector.extract_strided_slice %19 {offsets = [0, 112], sizes = [57, 16], strides = [1, 1]} : vector<57x128xf32> to vector<57x16xf32>
    %64 = arith.truncf %63 : vector<57x16xf32> to vector<57x16xbf16>
    %c7 = arith.constant 7 : index
    %c0_43 = arith.constant 0 : index
    %c0_44 = arith.constant 0 : index
    %65 = vector.load %arg4[%c7, %c0_43, %c0_44] : memref<8x57x228xbf16, #tpu.memory_space<vmem>>, vector<1x57x228xbf16>
    %66 = vector.shape_cast %65 : vector<1x57x228xbf16> to vector<57x228xbf16>
    %cst_45 = arith.constant dense<0.000000e+00> : vector<16x228xf32>
    %67 = tpu.matmul %64, %66, %cst_45 {dimension_numbers = #tpu.dot_dimension_numbers<[0], [0], [1], [1], [0, 1, 1, 1], [], []>} : vector<57x16xbf16>, vector<57x228xbf16>, vector<16x228xf32> -> vector<16x228xf32>
    %68 = arith.addf %62, %67 : vector<16x228xf32>
    %69 = vector.broadcast %7 : vector<1x228xf32> to vector<16x228xf32>
    %70 = arith.addf %68, %69 : vector<16x228xf32>
    %cst_46 = arith.constant 0.000000e+00 : f32
    %71 = vector.broadcast %cst_46 : f32 to vector<16x228xf32>
    %72 = arith.maximumf %70, %71 : vector<16x228xf32>
    %cst_47 = arith.constant dense<0.000000e+00> : vector<16x8xf32>
    %73 = tpu.matmul %72, %9, %cst_47 {dimension_numbers = #tpu.dot_dimension_numbers<[1], [1], [0], [0], [0, 0, 1, 0], [], []>} : vector<16x228xf32>, vector<8x228xf32>, vector<16x8xf32> -> vector<16x8xf32>
    %74 = vector.broadcast %8 : vector<1x8xf32> to vector<16x8xf32>
    %75 = arith.addf %73, %74 : vector<16x8xf32>
    %cst_48 = arith.constant dense<0xFF800000> : vector<16xf32>
    %76 = vector.multi_reduction <maximumf>, %75, %cst_48 [1] : vector<16x8xf32> to vector<16xf32>
    %77 = vector.shape_cast %76 : vector<16xf32> to vector<16x1xf32>
    %78 = vector.broadcast %77 : vector<16x1xf32> to vector<16x8xf32>
    %79 = arith.subf %75, %78 : vector<16x8xf32>
    %80 = math.exp %79 : vector<16x8xf32>
    %cst_49 = arith.constant dense<0.000000e+00> : vector<16xf32>
    %81 = vector.multi_reduction <add>, %80, %cst_49 [1] : vector<16x8xf32> to vector<16xf32>
    %82 = vector.shape_cast %81 : vector<16xf32> to vector<16x1xf32>
    %83 = vector.broadcast %82 : vector<16x1xf32> to vector<16x8xf32>
    %84 = arith.divf %80, %83 : vector<16x8xf32>
    %c0_50 = arith.constant 0 : index
    %c0_51 = arith.constant 0 : index
    %85 = vector.load %arg6[%c0_50, %c0_51] : memref<16x8xf32, #tpu.memory_space<vmem>>, vector<16x8xf32>
    tpu.vector_store %arg6[%c0_50, %c0_51], %84 {strides = array<i32>} : memref<16x8xf32, #tpu.memory_space<vmem>>, vector<16x8xf32>,
    return
  }
  func.func @transform_0(%arg0: i32) -> (i32, i32, i32) {
    %c0_i32 = arith.constant 0 : i32
    %c0_i32_0 = arith.constant 0 : i32
    %c0_i32_1 = arith.constant 0 : i32
    return %arg0, %c0_i32, %c0_i32_0 : i32, i32, i32
  }
  func.func @transform_1(%arg0: i32) -> (i32, i32) {
    %c0_i32 = arith.constant 0 : i32
    %c0_i32_0 = arith.constant 0 : i32
    %c0_i32_1 = arith.constant 0 : i32
    return %c0_i32, %c0_i32_0 : i32, i32
  }
  func.func @transform_2(%arg0: i32) -> (i32, i32) {
    %c0_i32 = arith.constant 0 : i32
    %c0_i32_0 = arith.constant 0 : i32
    %c0_i32_1 = arith.constant 0 : i32
    return %c0_i32, %c0_i32_0 : i32, i32
  }
  func.func @transform_3(%arg0: i32) -> (i32, i32, i32) {
    %c0_i32 = arith.constant 0 : i32
    %c0_i32_0 = arith.constant 0 : i32
    %c0_i32_1 = arith.constant 0 : i32
    %c0_i32_2 = arith.constant 0 : i32
    return %c0_i32, %c0_i32_0, %c0_i32_1 : i32, i32, i32
  }
  func.func @transform_4(%arg0: i32) -> (i32, i32) {
    %c0_i32 = arith.constant 0 : i32
    %c0_i32_0 = arith.constant 0 : i32
    %c0_i32_1 = arith.constant 0 : i32
    return %c0_i32, %c0_i32_0 : i32, i32
  }
  func.func @transform_5(%arg0: i32) -> (i32, i32) {
    %c0_i32 = arith.constant 0 : i32
    %c0_i32_0 = arith.constant 0 : i32
    return %arg0, %c0_i32 : i32, i32
  }
}

</mosaic_0001>

<llo_original>
// kernel: gcn_forward.1
$region0: #{gcn_forward.1}
  #allocation0 [shape = 'u32[]', space=smem, size = 0x4, offset = 0x4, fixed_abs, tag = 'smem constant byte address 0x4 - core index']
  #allocation1 [shape = 'u32[144,128]{1,0:T(1,128)}', space=vmem, size = 0x12000, scoped, tag = 'internal scratch']
  %s0 = inlined_call_operand.vmem [shape: f32[2,57,64], index: 0, kind: input, shape index: {}]
  %s1 = inlined_call_operand.vmem [shape: f32[57,57], index: 1, kind: input, shape index: {}]
  %s2 = inlined_call_operand.vmem [shape: f32[192,128], index: 2, kind: input, shape index: {}]
  %s3 = inlined_call_operand.vmem [shape: bf16[8,57,228], index: 3, kind: input, shape index: {}]
  %s4 = inlined_call_operand.vmem [shape: f32[16,256], index: 4, kind: input, shape index: {}]
  %s5 = inlined_call_operand.vmem [shape: f32[32,8], index: 5, kind: output, shape index: {}]
  %s6 = sld [smem:[#allocation0]]
  $region53: #{gcn_forward.1} parent=0
    _
  %s8 = ssub.s32 1, %s6
  %s9 = scalar_select 0, %s8, %s6
  loop: start=0, step=1, limit=4
  $region2: #{gcn_forward.1} parent=0 // loop_pre_header
    _
  $region3: #{gcn_forward.1} parent=0 // loop_header
    %s11 = sphi 0, %s15
    %p12 = scmp.ge.s32.totalorder %s11, 4
    %s21 = sphi 0, %s23
    %s24 = sphi 0, %s21
    %s25 = sphi 0, %s24
    %s41 = sphi 0, %s25
    %s45 = sphi 0, %s45
    %s47 = sphi 0, %s45
    %s48 = sphi 0, %s47
    %s62 = sphi 0, %s48
    %s66 = sphi 0, %s66
    %s68 = sphi 0, %s66
    %s69 = sphi 0, %s68
    %s83 = sphi 0, %s69
    %s87 = sphi 0, %s87
    %s89 = sphi 0, %s87
    %s90 = sphi 0, %s89
    %s104 = sphi 0, %s90
    %s108 = sphi 0, %s108
    %s110 = sphi 0, %s108
    %s111 = sphi 0, %s110
    %s125 = sphi 0, %s111
    %s131 = sphi 0, %s133
    %s134 = sphi 0, %s131
    %s135 = sphi 0, %s134
    %s151 = sphi 0, %s135
  $region4: #{gcn_forward.1} parent=0 // loop_header_branch
    %14 = sbr.rel (%p12) target = $region8
  $region5: #{gcn_forward.1} parent=0 // loop_body
    %s16 = ssub.s32 %s11, 1
    %s17 = ssub.s32 %s11, 2
    %s18 = sadd.s32 %s11, 1
    %s19 = ssub.s32 %s11, %s18
    %p20 = scmp.eq.s32.totalorder %s19, 0
    %s22 = sadd.s32 %s21, 1
    %s23 = scalar_select %p20, %s21, %s22
    %p26 = pneg %p20
    %p27 = scmp.eq.s32.totalorder %s11, 1
    %p28 = por %p26, %p27
    %p29 = scmp.ne.s32.totalorder %s21, %s24
    %p30 = scmp.eq.s32.totalorder %s11, 0
    %p31 = por %p29, %p30
    %p32 = scmp.ne.s32.totalorder %s21, %s24
    %p33 = scmp.eq.s32.totalorder %s16, 1
    %p34 = por %p32, %p33
    %p35 = scmp.ne.s32.totalorder %s24, %s25
    %p36 = scmp.eq.s32.totalorder %s16, 0
    %p37 = por %p35, %p36
    %p38 = scmp.ne.s32.totalorder %s24, %s25
    %p39 = scmp.eq.s32.totalorder %s17, 1
    %p40 = por %p38, %p39
    %p42 = scmp.ne.s32.totalorder %s25, %s41
    %p43 = scmp.eq.s32.totalorder %s17, 0
    %p44 = por %p42, %p43
    %s46 = sadd.s32 %s45, 1
    %p49 = scmp.eq.s32.totalorder %s11, 1
    %p50 = scmp.ne.s32.totalorder %s45, %s47
    %p51 = scmp.eq.s32.totalorder %s11, 0
    %p52 = por %p50, %p51
    %p53 = scmp.ne.s32.totalorder %s45, %s47
    %p54 = scmp.eq.s32.totalorder %s16, 1
    %p55 = por %p53, %p54
    %p56 = scmp.ne.s32.totalorder %s47, %s48
    %p57 = scmp.eq.s32.totalorder %s16, 0
    %p58 = por %p56, %p57
    %p59 = scmp.ne.s32.totalorder %s47, %s48
    %p60 = scmp.eq.s32.totalorder %s17, 1
    %p61 = por %p59, %p60
    %p63 = scmp.ne.s32.totalorder %s48, %s62
    %p64 = scmp.eq.s32.totalorder %s17, 0
    %p65 = por %p63, %p64
    %s67 = sadd.s32 %s66, 1
    %p70 = scmp.eq.s32.totalorder %s11, 1
    %p71 = scmp.ne.s32.totalorder %s66, %s68
    %p72 = scmp.eq.s32.totalorder %s11, 0
    %p73 = por %p71, %p72
    %p74 = scmp.ne.s32.totalorder %s66, %s68
    %p75 = scmp.eq.s32.totalorder %s16, 1
    %p76 = por %p74, %p75
    %p77 = scmp.ne.s32.totalorder %s68, %s69
    %p78 = scmp.eq.s32.totalorder %s16, 0
    %p79 = por %p77, %p78
    %p80 = scmp.ne.s32.totalorder %s68, %s69
    %p81 = scmp.eq.s32.totalorder %s17, 1
    %p82 = por %p80, %p81
    %p84 = scmp.ne.s32.totalorder %s69, %s83
    %p85 = scmp.eq.s32.totalorder %s17, 0
    %p86 = por %p84, %p85
    %s88 = sadd.s32 %s87, 1
    %p91 = scmp.eq.s32.totalorder %s11, 1
    %p92 = scmp.ne.s32.totalorder %s87, %s89
    %p93 = scmp.eq.s32.totalorder %s11, 0
    %p94 = por %p92, %p93
    %p95 = scmp.ne.s32.totalorder %s87, %s89
    %p96 = scmp.eq.s32.totalorder %s16, 1
    %p97 = por %p95, %p96
    %p98 = scmp.ne.s32.totalorder %s89, %s90
    %p99 = scmp.eq.s32.totalorder %s16, 0
    %p100 = por %p98, %p99
    %p101 = scmp.ne.s32.totalorder %s89, %s90
    %p102 = scmp.eq.s32.totalorder %s17, 1
    %p103 = por %p101, %p102
    %p105 = scmp.ne.s32.totalorder %s90, %s104
    %p106 = scmp.eq.s32.totalorder %s17, 0
    %p107 = por %p105, %p106
    %s109 = sadd.s32 %s108, 1
    %p112 = scmp.eq.s32.totalorder %s11, 1
    %p113 = scmp.ne.s32.totalorder %s108, %s110
    %p114 = scmp.eq.s32.totalorder %s11, 0
    %p115 = por %p113, %p114
    %p116 = scmp.ne.s32.totalorder %s108, %s110
    %p117 = scmp.eq.s32.totalorder %s16, 1
    %p118 = por %p116, %p117
    %p119 = scmp.ne.s32.totalorder %s110, %s111
    %p120 = scmp.eq.s32.totalorder %s16, 0
    %p121 = por %p119, %p120
    %p122 = scmp.ne.s32.totalorder %s110, %s111
    %p123 = scmp.eq.s32.totalorder %s17, 1
    %p124 = por %p122, %p123
    %p126 = scmp.ne.s32.totalorder %s111, %s125
    %p127 = scmp.eq.s32.totalorder %s17, 0
    %p128 = por %p126, %p127
    %s129 = ssub.s32 %s11, %s18
    %p130 = scmp.eq.s32.totalorder %s129, 0
    %s132 = sadd.s32 %s131, 1
    %s133 = scalar_select %p130, %s131, %s132
    %p136 = pneg %p130
    %p137 = scmp.eq.s32.totalorder %s11, 1
    %p138 = por %p136, %p137
    %p139 = scmp.ne.s32.totalorder %s131, %s134
    %p140 = scmp.eq.s32.totalorder %s11, 0
    %p141 = por %p139, %p140
    %p142 = scmp.ne.s32.totalorder %s131, %s134
    %p143 = scmp.eq.s32.totalorder %s16, 1
    %p144 = por %p142, %p143
    %p145 = scmp.ne.s32.totalorder %s134, %s135
    %p146 = scmp.eq.s32.totalorder %s16, 0
    %p147 = por %p145, %p146
    %p148 = scmp.ne.s32.totalorder %s134, %s135
    %p149 = scmp.eq.s32.totalorder %s17, 1
    %p150 = por %p148, %p149
    %p152 = scmp.ne.s32.totalorder %s135, %s151
    %p153 = scmp.eq.s32.totalorder %s17, 0
    %p154 = por %p152, %p153
    %p155 = scmp.le.s32.totalorder 1, %s11
    %p156 = scmp.lt.s32.totalorder %s11, 3
    %p157 = pnand %p155, %p156
    %p158 = pneg %p157
    // Predicated region
    $region9: #{gcn_forward.1} parent=5 // pred_check
      _
    $region10: #{gcn_forward.1} parent=5 // pred_check_branch
      %160 = sbr.rel (%p157) target = $region12
    $region11: #{gcn_forward.1} parent=5 // pred_region
      %s161 = ssub.s32 %s11, 1
      // Predicated region
      $region13: #{gcn_forward.1} parent=11 // pred_check
        %p162 = pneg %p58
      $region14: #{gcn_forward.1} parent=11 // pred_check_branch
        %164 = sbr.rel (%p162) target = $region16
      $region15: #{gcn_forward.1} parent=11 // pred_region
        _
      $region16: #{gcn_forward.1} parent=11 // pred_fallthru
        _
      // Predicated region
      $region17: #{gcn_forward.1} parent=11 // pred_check
        %p165 = pneg %p79
      $region18: #{gcn_forward.1} parent=11 // pred_check_branch
        %167 = sbr.rel (%p165) target = $region20
      $region19: #{gcn_forward.1} parent=11 // pred_region
        _
      $region20: #{gcn_forward.1} parent=11 // pred_fallthru
        _
      // Predicated region
      $region21: #{gcn_forward.1} parent=11 // pred_check
        %p168 = pneg %p100
      $region22: #{gcn_forward.1} parent=11 // pred_check_branch
        %170 = sbr.rel (%p168) target = $region24
      $region23: #{gcn_forward.1} parent=11 // pred_region
        _
      $region24: #{gcn_forward.1} parent=11 // pred_fallthru
        _
      // Predicated region
      $region25: #{gcn_forward.1} parent=11 // pred_check
        %p171 = pneg %p121
      $region26: #{gcn_forward.1} parent=11 // pred_check_branch
        %173 = sbr.rel (%p171) target = $region28
      $region27: #{gcn_forward.1} parent=11 // pred_region
        _
      $region28: #{gcn_forward.1} parent=11 // pred_fallthru
        _
    $region12: #{gcn_forward.1} parent=5 // pred_fallthru
      _
    %p174 = scmp.lt.s32.totalorder %s11, 2
    // Predicated region
    $region29: #{gcn_forward.1} parent=5 // pred_check
      %p175 = pneg %p174
    $region30: #{gcn_forward.1} parent=5 // pred_check_branch
      %177 = sbr.rel (%p175) target = $region32
    $region31: #{gcn_forward.1} parent=5 // pred_region
      // Predicated region
      $region33: #{gcn_forward.1} parent=31 // pred_check
        %p178 = pneg %p31
      $region34: #{gcn_forward.1} parent=31 // pred_check_branch
        %180 = sbr.rel (%p178) target = $region36
      $region35: #{gcn_forward.1} parent=31 // pred_region
        %p181 = scmp.lt.s32.totalorder %s11, 1
        %s182 = scalar_select %p181, %s11, 1
        %s183 = smul.addr %s182, 8
        %s184 = smul.addr %s183, 8
        %s185 = scalar_lea.vmem %s0, %s184
      $region36: #{gcn_forward.1} parent=31 // pred_fallthru
        _
    $region32: #{gcn_forward.1} parent=5 // pred_fallthru
      _
    %p186 = scmp.le.s32.totalorder 1, %s11
    %p187 = scmp.lt.s32.totalorder %s11, 3
    %p188 = pnand %p186, %p187
    %p189 = pneg %p188
    // Predicated region
    $region37: #{gcn_forward.1} parent=5 // pred_check
      _
    $region38: #{gcn_forward.1} parent=5 // pred_check_branch
      %191 = sbr.rel (%p188) target = $region40
    $region39: #{gcn_forward.1} parent=5 // pred_region
      %s192 = ssub.s32 %s11, 1
      %p193 = scmp.lt.s32.totalorder %s16, 1
      %s194 = scalar_select %p193, %s16, 1
      %s195 = smul.addr %s194, 8
      %s196 = smul.addr %s195, 8
      %s197 = scalar_lea.vmem %s0, %s196
      %p198 = pneg %p37
      %p199 = pneg %p34
      %p200 = pneg %p58
      %p201 = pneg %p55
      %p202 = pneg %p79
      %p203 = pneg %p76
      %p204 = pneg %p100
      %p205 = pneg %p97
      %p206 = pneg %p121
      %p207 = pneg %p118
      %p208 = pneg %p147
      %p209 = pneg %p144
      %s210 = smul.u32 2, %s16
      %p211 = scmp.lt.s32.totalorder %s210, 3
      %s212 = scalar_select %p211, %s210, 3
      %s213 = smul.addr %s212, 8
      %s214 = scalar_lea.vmem %s5, %s213
      %p215 = scmp.lt.s32.totalorder %s16, 1
      %s216 = scalar_select %p215, %s16, 1
      %s217 = smul.addr %s216, 8
      %s218 = smul.addr %s217, 8
      %s219 = scalar_lea.vmem %s0, %s218
      %s220 = smul.u32 2, %s16
      %p221 = scmp.lt.s32.totalorder %s220, 3
      %s222 = scalar_select %p221, %s220, 3
      %s223 = smul.addr %s222, 8
      %s224 = scalar_lea.vmem %s5, %s223
      %s225 = smul.u32 2, %s16
      %v227 = vld [vmem:[%s1] sm:$0xff]
      %v228 = vld [vmem:[%s1 + $0x8] sm:$0xff]
      %v229 = vld [vmem:[%s1 + $0x10] sm:$0xff]
      %v230 = vld [vmem:[%s1 + $0x18] sm:$0xff]
      %v231 = vld [vmem:[%s1 + $0x20] sm:$0xff]
      %v232 = vld [vmem:[%s1 + $0x28] sm:$0xff]
      %v233 = vld [vmem:[%s1 + $0x30] sm:$0xff]
      %v234 = vld [vmem:[%s1 + $0x38] sm:$0x1]
      %v235 = vld [vmem:[%s219] sm:$0xff]
      %v236 = vld [vmem:[%s219 + $0x8] sm:$0xff]
      %v237 = vld [vmem:[%s219 + $0x10] sm:$0xff]
      %v238 = vld [vmem:[%s219 + $0x18] sm:$0xff]
      %v239 = vld [vmem:[%s219 + $0x20] sm:$0xff]
      %v240 = vld [vmem:[%s219 + $0x28] sm:$0xff]
      %v241 = vld [vmem:[%s219 + $0x30] sm:$0xff]
      %v242 = vld [vmem:[%s219 + $0x38] sm:$0x1]
      %v243 = vld [vmem:[%s2] sm:$0xff]
      %v244 = vld [vmem:[%s2 + $0x8] sm:$0xff]
      %v245 = vld [vmem:[%s2 + $0x10] sm:$0xff]
      %v246 = vld [vmem:[%s2 + $0x18] sm:$0xff]
      %v247 = vld [vmem:[%s2 + $0x20] sm:$0xff]
      %v248 = vld [vmem:[%s2 + $0x28] sm:$0xff]
      %v249 = vld [vmem:[%s2 + $0x30] sm:$0xff]
      %v250 = vld [vmem:[%s2 + $0x38] sm:$0xff]
      %v251 = vld [vmem:[%s2 + $0x40] sm:$0xff]
      %v252 = vld [vmem:[%s2 + $0x48] sm:$0xff]
      %v253 = vld [vmem:[%s2 + $0x50] sm:$0xff]
      %v254 = vld [vmem:[%s2 + $0x58] sm:$0xff]
      %v255 = vld [vmem:[%s2 + $0x60] sm:$0xff]
      %v256 = vld [vmem:[%s2 + $0x68] sm:$0xff]
      %v257 = vld [vmem:[%s2 + $0x70] sm:$0xff]
      %v258 = vld [vmem:[%s2 + $0x78] sm:$0xff]
      %v259 = vld [vmem:[%s2 + $0x80] sm:$0xff]
      %v260 = vld [vmem:[%s2 + $0x88] sm:$0xff]
      %v261 = vld [vmem:[%s2 + $0x90] sm:$0xff]
      %v262 = vld [vmem:[%s2 + $0x98] sm:$0xff]
      %v263 = vld [vmem:[%s2 + $0xa0] sm:$0xff]
      %v264 = vld [vmem:[%s2 + $0xa8] sm:$0xff]
      %v265 = vld [vmem:[%s2 + $0xb0] sm:$0xff]
      %v266 = vld [vmem:[%s2 + $0xb8] sm:$0xff]
      %v267 = vld [vmem:[%s4] ss:$0 sm:$0xff]
      %v268 = vld [vmem:[%s4 + $0x1] ss:$0 sm:$0xff]
      %s269 = scalar_lea.vmem %s4, 2
      %v270 = vld [vmem:[%s269] ss:$8 sm:$0x3]
      %v271 = vld [vmem:[%s4 + $0x3] ss:$0 sm:$0xff]
      %v272 = vld [vmem:[%s4 + $0x10] sm:$0xff]
      %v273 = vld [vmem:[%s4 + $0x18] sm:$0xff]
      %vm274 = vcmask 523264
      %v276 = vsel %vm274, %v235, 0
      %v279 = vsel %vm274, %v236, 0
      %v282 = vsel %vm274, %v237, 0
      %v285 = vsel %vm274, %v238, 0
      %v288 = vsel %vm274, %v239, 0
      %v291 = vsel %vm274, %v240, 0
      %v294 = vsel %vm274, %v241, 0
      %v297 = vsel %vm274, %v242, 0
      %299 = vmatprep.subr.mxu0 0.0
      %300 = vmatpush1.msra.mxu0 %v243
      %301 = vmatprep.subr.mxu0 0.0
      %302 = vmatpush1.msra.mxu0 %v244
      %303 = vmatprep.subr.mxu0 0.0
      %304 = vmatpush1.msra.mxu0 %v245
      %305 = vmatprep.subr.mxu0 0.0
      %306 = vmatpush1.msra.mxu0 %v246
      %307 = vmatprep.subr.mxu0 0.0
      %308 = vmatpush1.msra.mxu0 %v247
      %309 = vmatprep.subr.mxu0 0.0
      %310 = vmatpush1.msra.mxu0 %v248
      %311 = vmatprep.subr.mxu0 0.0
      %312 = vmatpush1.msra.mxu0 %v249
      %313 = vmatprep.subr.mxu0 0.0
      %314 = vmatpush1.msra.mxu0 %v250
      %315 = vmatprep.subr.mxu0 0.0
      %316 = vmatpush1.msra.mxu0 0.0
      %317 = vmatprep.subr.mxu0 0.0
      %318 = vmatpush1.msra.mxu0 0.0
      %319 = vmatprep.subr.mxu0 0.0
      %320 = vmatpush1.msra.mxu0 0.0
      %321 = vmatprep.subr.mxu0 0.0
      %322 = vmatpush1.msra.mxu0 0.0
      %323 = vmatprep.subr.mxu0 0.0
      %324 = vmatpush1.msra.mxu0 0.0
      %325 = vmatprep.subr.mxu0 0.0
      %326 = vmatpush1.msra.mxu0 0.0
      %327 = vmatprep.subr.mxu0 0.0
      %328 = vmatpush1.msra.mxu0 0.0
      %329 = vmatprep.subr.mxu0 0.0
      %330 = vmatpush1.msra.mxu0 0.0
      %331 = vmatprep.subr.mxu0 0.0
      %332 = vmatpush1.msra.mxu0 0.0
      %333 = vmatprep.subr.mxu0 0.0
      %334 = vmatpush1.msra.mxu0 0.0
      %335 = vmatprep.subr.mxu0 0.0
      %336 = vmatpush1.msra.mxu0 0.0
      %337 = vmatprep.subr.mxu0 0.0
      %338 = vmatpush1.msra.mxu0 0.0
      %339 = vmatprep.subr.mxu0 0.0
      %340 = vmatpush1.msra.mxu0 0.0
      %341 = vmatprep.subr.mxu0 0.0
      %342 = vmatpush1.msra.mxu0 0.0
      %343 = vmatprep.subr.mxu0 0.0
      %344 = vmatpush1.msra.mxu0 0.0
      %345 = vmatprep.subr.mxu0 0.0
      %346 = vmatpush1.msra.mxu0 0.0
      %347 = vmatprep.subr.mxu0 0.0
      %348 = vmatpush1.msra.mxu0 0.0
      %349 = vmatprep.subr.mxu0 0.0
      %350 = vmatpush1.msra.mxu0 0.0
      %351 = vmatprep.subr.mxu0 0.0
      %352 = vmatpush1.msra.mxu0 0.0
      %353 = vmatprep.subr.mxu0 0.0
      %354 = vmatpush1.msra.mxu0 0.0
      %355 = vmatprep.subr.mxu0 0.0
      %356 = vmatpush1.msra.mxu0 0.0
      %357 = vmatprep.subr.mxu0 0.0
      %358 = vmatpush1.msra.mxu0 0.0
      %359 = vmatprep.subr.mxu0 0.0
      %360 = vmatpush1.msra.mxu0 0.0
      %361 = vmatprep.subr.mxu0 0.0
      %362 = vmatpush1.msra.mxu0 0.0
      %363 = vmatprep.mubr.f32.mxu0 0.0
      %364 = vmatmul.mubr.f32.gmra.mrb[0].mxu0 %v276
      %v365 = vpop.f32.mrb[0].mxu0
      %v366 = vadd.f32 0.0, %v365
      %v367 = vpop.f32.mrb[0].mxu0
      %368 = vmatprep.mubr.f32.mxu0 0.0
      %369 = vmatmul.mubr.f32.gmra.mrb[0].mxu0 %v279
      %v370 = vpop.f32.mrb[0].mxu0
      %v371 = vadd.f32 0.0, %v370
      %v372 = vpop.f32.mrb[0].mxu0
      %373 = vmatprep.mubr.f32.mxu0 0.0
      %374 = vmatmul.mubr.f32.gmra.mrb[0].mxu0 %v282
      %v375 = vpop.f32.mrb[0].mxu0
      %v376 = vadd.f32 0.0, %v375
      %v377 = vpop.f32.mrb[0].mxu0
      %378 = vmatprep.mubr.f32.mxu0 0.0
      %379 = vmatmul.mubr.f32.gmra.mrb[0].mxu0 %v285
      %v380 = vpop.f32.mrb[0].mxu0
      %v381 = vadd.f32 0.0, %v380
      %v382 = vpop.f32.mrb[0].mxu0
      %383 = vmatprep.mubr.f32.mxu0 0.0
      %384 = vmatmul.mubr.f32.gmra.mrb[0].mxu0 %v288
      %v385 = vpop.f32.mrb[0].mxu0
      %v386 = vadd.f32 0.0, %v385
      %v387 = vpop.f32.mrb[0].mxu0
      %388 = vmatprep.mubr.f32.mxu0 0.0
      %389 = vmatmul.mubr.f32.gmra.mrb[0].mxu0 %v291
      %v390 = vpop.f32.mrb[0].mxu0
      %v391 = vadd.f32 0.0, %v390
      %v392 = vpop.f32.mrb[0].mxu0
      %393 = vmatprep.mubr.f32.mxu0 0.0
      %394 = vmatmul.mubr.f32.gmra.mrb[0].mxu0 %v294
      %v395 = vpop.f32.mrb[0].mxu0
      %v396 = vadd.f32 0.0, %v395
      %v397 = vpop.f32.mrb[0].mxu0
      %398 = vmatprep.mubr.f32.mxu0 0.0
      %399 = vmatmul.mubr.f32.gmra.mrb[0].mxu0 %v297
      %v400 = vpop.f32.mrb[0].mxu0
      %v401 = vadd.f32 0.0, %v400
      %v402 = vpop.f32.mrb[0].mxu0
      %403 = vdwg.mxu0
      %vm404 = vcmask 465920
      %v406 = vsel %vm404, %v227, 0
      %v409 = vsel %vm404, %v228, 0
      %v412 = vsel %vm404, %v229, 0
      %v415 = vsel %vm404, %v230, 0
      %v418 = vsel %vm404, %v231, 0
      %v421 = vsel %vm404, %v232, 0
      %v424 = vsel %vm404, %v233, 0
      %v427 = vsel %vm404, %v234, 0
      %vm429 = vcmask 1040384
      %v431 = vsel %vm429, %v401, 0
      %433 = vmatprep.subr.mxu0 0.0
      %434 = vmatpush1.msra.mxu0 %v366
      %435 = vmatprep.subr.mxu0 0.0
      %436 = vmatpush1.msra.mxu0 %v371
      %437 = vmatprep.subr.mxu0 0.0
      %438 = vmatpush1.msra.mxu0 %v376
      %439 = vmatprep.subr.mxu0 0.0
      %440 = vmatpush1.msra.mxu0 %v381
      %441 = vmatprep.subr.mxu0 0.0
      %442 = vmatpush1.msra.mxu0 %v386
      %443 = vmatprep.subr.mxu0 0.0
      %444 = vmatpush1.msra.mxu0 %v391
      %445 = vmatprep.subr.mxu0 0.0
      %446 = vmatpush1.msra.mxu0 %v396
      %447 = vmatprep.subr.mxu0 0.0
      %448 = vmatpush1.msra.mxu0 %v431
      %449 = vmatprep.subr.mxu0 0.0
      %450 = vmatpush1.msra.mxu0 0.0
      %451 = vmatprep.subr.mxu0 0.0
      %452 = vmatpush1.msra.mxu0 0.0
      %453 = vmatprep.subr.mxu0 0.0
      %454 = vmatpush1.msra.mxu0 0.0
      %455 = vmatprep.subr.mxu0 0.0
      %456 = vmatpush1.msra.mxu0 0.0
      %457 = vmatprep.subr.mxu0 0.0
      %458 = vmatpush1.msra.mxu0 0.0
      %459 = vmatprep.subr.mxu0 0.0
      %460 = vmatpush1.msra.mxu0 0.0
      %461 = vmatprep.subr.mxu0 0.0
      %462 = vmatpush1.msra.mxu0 0.0
      %463 = vmatprep.subr.mxu0 0.0
      %464 = vmatpush1.msra.mxu0 0.0
      %465 = vmatprep.subr.mxu0 0.0
      %466 = vmatpush1.msra.mxu0 0.0
      %467 = vmatprep.subr.mxu0 0.0
      %468 = vmatpush1.msra.mxu0 0.0
      %469 = vmatprep.subr.mxu0 0.0
      %470 = vmatpush1.msra.mxu0 0.0
      %471 = vmatprep.subr.mxu0 0.0
      %472 = vmatpush1.msra.mxu0 0.0
      %473 = vmatprep.subr.mxu0 0.0
      %474 = vmatpush1.msra.mxu0 0.0
      %475 = vmatprep.subr.mxu0 0.0
      %476 = vmatpush1.msra.mxu0 0.0
      %477 = vmatprep.subr.mxu0 0.0
      %478 = vmatpush1.msra.mxu0 0.0
      %479 = vmatprep.subr.mxu0 0.0
      %480 = vmatpush1.msra.mxu0 0.0
      %481 = vmatprep.subr.mxu0 0.0
      %482 = vmatpush1.msra.mxu0 0.0
      %483 = vmatprep.subr.mxu0 0.0
      %484 = vmatpush1.msra.mxu0 0.0
      %485 = vmatprep.subr.mxu0 0.0
      %486 = vmatpush1.msra.mxu0 0.0
      %487 = vmatprep.subr.mxu0 0.0
      %488 = vmatpush1.msra.mxu0 0.0
      %489 = vmatprep.subr.mxu0 0.0
      %490 = vmatpush1.msra.mxu0 0.0
      %491 = vmatprep.subr.mxu0 0.0
      %492 = vmatpush1.msra.mxu0 0.0
      %493 = vmatprep.subr.mxu0 0.0
      %494 = vmatpush1.msra.mxu0 0.0
      %495 = vmatprep.subr.mxu0 0.0
      %496 = vmatpush1.msra.mxu0 0.0
      %497 = vmatprep.mubr.f32.mxu0 0.0
      %498 = vmatmul.mubr.f32.gmra.mrb[0].mxu0 %v406
      %v499 = vpop.f32.mrb[0].mxu0
      %v500 = vadd.f32 %v267, %v499
      %v501 = vpop.f32.mrb[0].mxu0
      %502 = vmatprep.mubr.f32.mxu0 0.0
      %503 = vmatmul.mubr.f32.gmra.mrb[0].mxu0 %v409
      %v504 = vpop.f32.mrb[0].mxu0
      %v505 = vadd.f32 %v267, %v504
      %v506 = vpop.f32.mrb[0].mxu0
      %507 = vmatprep.mubr.f32.mxu0 0.0
      %508 = vmatmul.mubr.f32.gmra.mrb[0].mxu0 %v412
      %v509 = vpop.f32.mrb[0].mxu0
      %v510 = vadd.f32 %v267, %v509
      %v511 = vpop.f32.mrb[0].mxu0
      %512 = vmatprep.mubr.f32.mxu0 0.0
      %513 = vmatmul.mubr.f32.gmra.mrb[0].mxu0 %v415
      %v514 = vpop.f32.mrb[0].mxu0
      %v515 = vadd.f32 %v267, %v514
      %v516 = vpop.f32.mrb[0].mxu0
      %517 = vmatprep.mubr.f32.mxu0 0.0
      %518 = vmatmul.mubr.f32.gmra.mrb[0].mxu0 %v418
      %v519 = vpop.f32.mrb[0].mxu0
      %v520 = vadd.f32 %v267, %v519
      %v521 = vpop.f32.mrb[0].mxu0
      %522 = vmatprep.mubr.f32.mxu0 0.0
      %523 = vmatmul.mubr.f32.gmra.mrb[0].mxu0 %v421
      %v524 = vpop.f32.mrb[0].mxu0
      %v525 = vadd.f32 %v267, %v524
      %v526 = vpop.f32.mrb[0].mxu0
      %527 = vmatprep.mubr.f32.mxu0 0.0
      %528 = vmatmul.mubr.f32.gmra.mrb[0].mxu0 %v424
      %v529 = vpop.f32.mrb[0].mxu0
      %v530 = vadd.f32 %v267, %v529
      %v531 = vpop.f32.mrb[0].mxu0
      %532 = vmatprep.mubr.f32.mxu0 0.0
      %533 = vmatmul.mubr.f32.gmra.mrb[0].mxu0 %v427
      %v534 = vpop.f32.mrb[0].mxu0
      %v535 = vadd.f32 %v267, %v534
      %v536 = vpop.f32.mrb[0].mxu0
      %537 = vdwg.mxu0
      %v538 = vmax.f32 %v500, 0.0
      %v539 = vmax.f32 %v505, 0.0
      %v540 = vmax.f32 %v510, 0.0
      %v541 = vmax.f32 %v515, 0.0
      %v542 = vmax.f32 %v520, 0.0
      %v543 = vmax.f32 %v525, 0.0
      %v544 = vmax.f32 %v530, 0.0
      %v545 = vmax.f32 %v535, 0.0
      %546 = vmatprep.subr.mxu0 0.0
      %547 = vmatpush1.msra.mxu0 %v251
      %548 = vmatprep.subr.mxu0 0.0
      %549 = vmatpush1.msra.mxu0 %v252
      %550 = vmatprep.subr.mxu0 0.0
      %551 = vmatpush1.msra.mxu0 %v253
      %552 = vmatprep.subr.mxu0 0.0
      %553 = vmatpush1.msra.mxu0 %v254
      %554 = vmatprep.subr.mxu0 0.0
      %555 = vmatpush1.msra.mxu0 %v255
      %556 = vmatprep.subr.mxu0 0.0
      %557 = vmatpush1.msra.mxu0 %v256
      %558 = vmatprep.subr.mxu0 0.0
      %559 = vmatpush1.msra.mxu0 %v257
      %560 = vmatprep.subr.mxu0 0.0
      %561 = vmatpush1.msra.mxu0 %v258
      %562 = vmatprep.subr.mxu0 0.0
      %563 = vmatpush1.msra.mxu0 %v259
      %564 = vmatprep.subr.mxu0 0.0
      %565 = vmatpush1.msra.mxu0 %v260
      %566 = vmatprep.subr.mxu0 0.0
      %567 = vmatpush1.msra.mxu0 %v261
      %568 = vmatprep.subr.mxu0 0.0
      %569 = vmatpush1.msra.mxu0 %v262
      %570 = vmatprep.subr.mxu0 0.0
      %571 = vmatpush1.msra.mxu0 %v263
      %572 = vmatprep.subr.mxu0 0.0
      %573 = vmatpush1.msra.mxu0 %v264
      %574 = vmatprep.subr.mxu0 0.0
      %575 = vmatpush1.msra.mxu0 %v265
      %576 = vmatprep.subr.mxu0 0.0
      %577 = vmatpush1.msra.mxu0 %v266
      %578 = vmatprep.subr.mxu0 0.0
      %579 = vmatpush1.msra.mxu0 0.0
      %580 = vmatprep.subr.mxu0 0.0
      %581 = vmatpush1.msra.mxu0 0.0
      %582 = vmatprep.subr.mxu0 0.0
      %583 = vmatpush1.msra.mxu0 0.0
      %584 = vmatprep.subr.mxu0 0.0
      %585 = vmatpush1.msra.mxu0 0.0
      %586 = vmatprep.subr.mxu0 0.0
      %587 = vmatpush1.msra.mxu0 0.0
      %588 = vmatprep.subr.mxu0 0.0
      %589 = vmatpush1.msra.mxu0 0.0
      %590 = vmatprep.subr.mxu0 0.0
      %591 = vmatpush1.msra.mxu0 0.0
      %592 = vmatprep.subr.mxu0 0.0
      %593 = vmatpush1.msra.mxu0 0.0
      %594 = vmatprep.subr.mxu0 0.0
      %595 = vmatpush1.msra.mxu0 0.0
      %596 = vmatprep.subr.mxu0 0.0
      %597 = vmatpush1.msra.mxu0 0.0
      %598 = vmatprep.subr.mxu0 0.0
      %599 = vmatpush1.msra.mxu0 0.0
      %600 = vmatprep.subr.mxu0 0.0
      %601 = vmatpush1.msra.mxu0 0.0
      %602 = vmatprep.subr.mxu0 0.0
      %603 = vmatpush1.msra.mxu0 0.0
      %604 = vmatprep.subr.mxu0 0.0
      %605 = vmatpush1.msra.mxu0 0.0
      %606 = vmatprep.subr.mxu0 0.0
      %607 = vmatpush1.msra.mxu0 0.0
      %608 = vmatprep.subr.mxu0 0.0
      %609 = vmatpush1.msra.mxu0 0.0
      %610 = vmatprep.mubr.f32.mxu0 0.0
      %611 = vmatmul.mubr.f32.gmra.mrb[0].mxu0 %v538
      %v612 = vpop.f32.mrb[0].mxu0
      %v613 = vadd.f32 0.0, %v612
      %v614 = vpop.f32.mrb[0].mxu0
      %615 = vmatprep.mubr.f32.mxu0 0.0
      %616 = vmatmul.mubr.f32.gmra.mrb[0].mxu0 %v539
      %v617 = vpop.f32.mrb[0].mxu0
      %v618 = vadd.f32 0.0, %v617
      %v619 = vpop.f32.mrb[0].mxu0
      %620 = vmatprep.mubr.f32.mxu0 0.0
      %621 = vmatmul.mubr.f32.gmra.mrb[0].mxu0 %v540
      %v622 = vpop.f32.mrb[0].mxu0
      %v623 = vadd.f32 0.0, %v622
      %v624 = vpop.f32.mrb[0].mxu0
      %625 = vmatprep.mubr.f32.mxu0 0.0
      %626 = vmatmul.mubr.f32.gmra.mrb[0].mxu0 %v541
      %v627 = vpop.f32.mrb[0].mxu0
      %v628 = vadd.f32 0.0, %v627
      %v629 = vpop.f32.mrb[0].mxu0
      %630 = vmatprep.mubr.f32.mxu0 0.0
      %631 = vmatmul.mubr.f32.gmra.mrb[0].mxu0 %v542
      %v632 = vpop.f32.mrb[0].mxu0
      %v633 = vadd.f32 0.0, %v632
      %v634 = vpop.f32.mrb[0].mxu0
      %635 = vmatprep.mubr.f32.mxu0 0.0
      %636 = vmatmul.mubr.f32.gmra.mrb[0].mxu0 %v543
      %v637 = vpop.f32.mrb[0].mxu0
      %v638 = vadd.f32 0.0, %v637
      %v639 = vpop.f32.mrb[0].mxu0
      %640 = vmatprep.mubr.f32.mxu0 0.0
      %641 = vmatmul.mubr.f32.gmra.mrb[0].mxu0 %v544
      %v642 = vpop.f32.mrb[0].mxu0
      %v643 = vadd.f32 0.0, %v642
      %v644 = vpop.f32.mrb[0].mxu0
      %645 = vmatprep.mubr.f32.mxu0 0.0
      %646 = vmatmul.mubr.f32.gmra.mrb[0].mxu0 %v545
      %v647 = vpop.f32.mrb[0].mxu0
      %v648 = vadd.f32 0.0, %v647
      %v649 = vpop.f32.mrb[0].mxu0
      %650 = vdwg.mxu0
      %v652 = vsel %vm429, %v648, 0
      %654 = vmatprep.subr.mxu0 0.0
      %655 = vmatpush1.msra.mxu0 %v613
      %656 = vmatprep.subr.mxu0 0.0
      %657 = vmatpush1.msra.mxu0 %v618
      %658 = vmatprep.subr.mxu0 0.0
      %659 = vmatpush1.msra.mxu0 %v623
      %660 = vmatprep.subr.mxu0 0.0
      %661 = vmatpush1.msra.mxu0 %v628
      %662 = vmatprep.subr.mxu0 0.0
      %663 = vmatpush1.msra.mxu0 %v633
      %664 = vmatprep.subr.mxu0 0.0
      %665 = vmatpush1.msra.mxu0 %v638
      %666 = vmatprep.subr.mxu0 0.0
      %667 = vmatpush1.msra.mxu0 %v643
      %668 = vmatprep.subr.mxu0 0.0
      %669 = vmatpush1.msra.mxu0 %v652
      %670 = vmatprep.subr.mxu0 0.0
      %671 = vmatpush1.msra.mxu0 0.0
      %672 = vmatprep.subr.mxu0 0.0
      %673 = vmatpush1.msra.mxu0 0.0
      %674 = vmatprep.subr.mxu0 0.0
      %675 = vmatpush1.msra.mxu0 0.0
      %676 = vmatprep.subr.mxu0 0.0
      %677 = vmatpush1.msra.mxu0 0.0
      %678 = vmatprep.subr.mxu0 0.0
      %679 = vmatpush1.msra.mxu0 0.0
      %680 = vmatprep.subr.mxu0 0.0
      %681 = vmatpush1.msra.mxu0 0.0
      %682 = vmatprep.subr.mxu0 0.0
      %683 = vmatpush1.msra.mxu0 0.0
      %684 = vmatprep.subr.mxu0 0.0
      %685 = vmatpush1.msra.mxu0 0.0
      %686 = vmatprep.subr.mxu0 0.0
      %687 = vmatpush1.msra.mxu0 0.0
      %688 = vmatprep.subr.mxu0 0.0
      %689 = vmatpush1.msra.mxu0 0.0
      %690 = vmatprep.subr.mxu0 0.0
      %691 = vmatpush1.msra.mxu0 0.0
      %692 = vmatprep.subr.mxu0 0.0
      %693 = vmatpush1.msra.mxu0 0.0
      %694 = vmatprep.subr.mxu0 0.0
      %695 = vmatpush1.msra.mxu0 0.0
      %696 = vmatprep.subr.mxu0 0.0
      %697 = vmatpush1.msra.mxu0 0.0
      %698 = vmatprep.subr.mxu0 0.0
      %699 = vmatpush1.msra.mxu0 0.0
      %700 = vmatprep.subr.mxu0 0.0
      %701 = vmatpush1.msra.mxu0 0.0
      %702 = vmatprep.subr.mxu0 0.0
      %703 = vmatpush1.msra.mxu0 0.0
      %704 = vmatprep.subr.mxu0 0.0
      %705 = vmatpush1.msra.mxu0 0.0
      %706 = vmatprep.subr.mxu0 0.0
      %707 = vmatpush1.msra.mxu0 0.0
      %708 = vmatprep.subr.mxu0 0.0
      %709 = vmatpush1.msra.mxu0 0.0
      %710 = vmatprep.subr.mxu0 0.0
      %711 = vmatpush1.msra.mxu0 0.0
      %712 = vmatprep.subr.mxu0 0.0
      %713 = vmatpush1.msra.mxu0 0.0
      %714 = vmatprep.subr.mxu0 0.0
      %715 = vmatpush1.msra.mxu0 0.0
      %716 = vmatprep.subr.mxu0 0.0
      %717 = vmatpush1.msra.mxu0 0.0
      %718 = vmatprep.mubr.f32.mxu0 0.0
      %719 = vmatmul.mubr.f32.gmra.mrb[0].mxu0 %v406
      %v720 = vpop.f32.mrb[0].mxu0
      %v721 = vadd.f32 %v268, %v720
      %v722 = vpop.f32.mrb[0].mxu0
      %723 = vmatprep.mubr.f32.mxu0 0.0
      %724 = vmatmul.mubr.f32.gmra.mrb[0].mxu0 %v409
      %v725 = vpop.f32.mrb[0].mxu0
      %v726 = vadd.f32 %v268, %v725
      %v727 = vpop.f32.mrb[0].mxu0
      %728 = vmatprep.mubr.f32.mxu0 0.0
      %729 = vmatmul.mubr.f32.gmra.mrb[0].mxu0 %v412
      %v730 = vpop.f32.mrb[0].mxu0
      %v731 = vadd.f32 %v268, %v730
      %v732 = vpop.f32.mrb[0].mxu0
      %733 = vmatprep.mubr.f32.mxu0 0.0
      %734 = vmatmul.mubr.f32.gmra.mrb[0].mxu0 %v415
      %v735 = vpop.f32.mrb[0].mxu0
      %v736 = vadd.f32 %v268, %v735
      %v737 = vpop.f32.mrb[0].mxu0
      %738 = vmatprep.mubr.f32.mxu0 0.0
      %739 = vmatmul.mubr.f32.gmra.mrb[0].mxu0 %v418
      %v740 = vpop.f32.mrb[0].mxu0
      %v741 = vadd.f32 %v268, %v740
      %v742 = vpop.f32.mrb[0].mxu0
      %743 = vmatprep.mubr.f32.mxu0 0.0
      %744 = vmatmul.mubr.f32.gmra.mrb[0].mxu0 %v421
      %v745 = vpop.f32.mrb[0].mxu0
      %v746 = vadd.f32 %v268, %v745
      %v747 = vpop.f32.mrb[0].mxu0
      %748 = vmatprep.mubr.f32.mxu0 0.0
      %749 = vmatmul.mubr.f32.gmra.mrb[0].mxu0 %v424
      %v750 = vpop.f32.mrb[0].mxu0
      %v751 = vadd.f32 %v268, %v750
      %v752 = vpop.f32.mrb[0].mxu0
      %753 = vmatprep.mubr.f32.mxu0 0.0
      %754 = vmatmul.mubr.f32.gmra.mrb[0].mxu0 %v427
      %v755 = vpop.f32.mrb[0].mxu0
      %v756 = vadd.f32 %v268, %v755
      %v757 = vpop.f32.mrb[0].mxu0
      %758 = vdwg.mxu0
      %v759 = vpack.c.bf16 %v726, %v721
      %v760 = vpack.c.bf16 %v736, %v731
      %v761 = vpack.c.bf16 %v746, %v741
      %v762 = vpack.c.bf16 %v756, %v751
      %v763 = vld [vmem:[%s3] sm:$0xff]
      %v764 = vld [vmem:[%s3 + $0x8] sm:$0xff]
      %v765 = vld [vmem:[%s3 + $0x10] sm:$0xff]
      %v766 = vld [vmem:[%s3 + $0x18] sm:$0xff]
      %v767 = vld [vmem:[%s3 + $0x20] sm:$0xff]
      %v768 = vld [vmem:[%s3 + $0x28] sm:$0xff]
      %v769 = vld [vmem:[%s3 + $0x30] sm:$0xff]
      %v770 = vld [vmem:[%s3 + $0x38] sm:$0x11]
      %s771 = scalar_lea.vmem %s3, 64
      %v772 = vld [vmem:[%s771] sm:$0xff]
      %v773 = vld [vmem:[%s771 + $0x8] sm:$0xff]
      %v774 = vld [vmem:[%s771 + $0x10] sm:$0xff]
      %v775 = vld [vmem:[%s771 + $0x18] sm:$0xff]
      %v776 = vld [vmem:[%s771 + $0x20] sm:$0xff]
      %v777 = vld [vmem:[%s771 + $0x28] sm:$0xff]
      %v778 = vld [vmem:[%s771 + $0x30] sm:$0xff]
      %v779 = vld [vmem:[%s771 + $0x38] sm:$0x11]
      %784 = vrot.lane.b32.xlu0 %v759, 112
      %v785 = vpop.permute.xlu0 %784
      %786 = vrot.lane.b32.xlu0 %v760, 112
      %v787 = vpop.permute.xlu0 %786
      %788 = vrot.lane.b32.xlu0 %v761, 112
      %v789 = vpop.permute.xlu0 %788
      %790 = vrot.lane.b32.xlu0 %v762, 112
      %v791 = vpop.permute.xlu0 %790
      %796 = vxpose.xlu0.c.b16.start [1/8] %v785, 128
      %797 = vxpose.xlu0.c.b16.cont [2/8] %v787, 128
      %798 = vxpose.xlu0.c.b16.cont [3/8] %v789, 128
      %799 = vxpose.xlu0.c.b16.cont [4/8] %v791, 128
      %800 = vxpose.xlu0.c.b16.cont [5/8] 0, 128
      %801 = vxpose.xlu0.c.b16.cont [6/8] 0, 128
      %802 = vxpose.xlu0.c.b16.cont [7/8] 0, 128
      %803 = vxpose.xlu0.c.b16.end [8/8] 0, 128
      %v804 = vpop.trf.xlu0
      %v805 = vpop.trf.xlu0
      %v806 = vpop.trf.xlu0
      %v807 = vpop.trf.xlu0
      %v808 = vpop.trf.xlu0
      %v809 = vpop.trf.xlu0
      %v810 = vpop.trf.xlu0
      %v811 = vpop.trf.xlu0
      %v820 = vunpack.c.l.b16 %v772
      %v821 = vunpack.c.h.b16 %v772
      %v822 = vunpack.c.l.b16 %v773
      %v823 = vunpack.c.h.b16 %v773
      %v824 = vunpack.c.l.b16 %v774
      %v825 = vunpack.c.h.b16 %v774
      %v826 = vunpack.c.l.b16 %v775
      %v827 = vunpack.c.h.b16 %v775
      %v828 = vunpack.c.l.b16 %v776
      %v829 = vunpack.c.h.b16 %v776
      %v830 = vunpack.c.l.b16 %v777
      %v831 = vunpack.c.h.b16 %v777
      %v832 = vunpack.c.l.b16 %v778
      %v833 = vunpack.c.h.b16 %v778
      %v834 = vunpack.c.l.b16 %v779
      %v835 = vunpack.c.h.b16 %v779
      %v836 = vpack.c.b16 %v822, %v820
      %v837 = vpack.c.b16 %v823, %v821
      %v838 = vpack.c.b16 %v826, %v824
      %v839 = vpack.c.b16 %v827, %v825
      %v840 = vpack.c.b16 %v830, %v828
      %v841 = vpack.c.b16 %v831, %v829
      %v842 = vpack.c.b16 %v834, %v832
      %v843 = vpack.c.b16 %v835, %v833
      %v851 = vsel %vm404, %v804, 0
      %vm853 = vcmask 1043456
      %vm854 = vcmask 1044480
      %v855 = vsel %vm853, 4294967295, 65535
      %v856 = vsel %vm854, %v855, 0
      %v858 = vand.u32 %v842, %v856
      %v861 = vand.u32 %v843, %v856
      %863 = vmatprep.subr.bf16.mxu0 %v837
      %864 = vmatpush1.bf16.msra.mxu0 %v836
      %865 = vmatprep.subr.bf16.mxu0 %v839
      %866 = vmatpush1.bf16.msra.mxu0 %v838
      %867 = vmatprep.subr.bf16.mxu0 %v841
      %868 = vmatpush1.bf16.msra.mxu0 %v840
      %869 = vmatprep.subr.bf16.mxu0 %v861
      %870 = vmatpush1.bf16.msra.mxu0 %v858
      %871 = vmatprep.subr.bf16.mxu0 0
      %872 = vmatpush1.bf16.msra.mxu0 0
      %873 = vmatprep.subr.bf16.mxu0 0
      %874 = vmatpush1.bf16.msra.mxu0 0
      %875 = vmatprep.subr.bf16.mxu0 0
      %876 = vmatpush1.bf16.msra.mxu0 0
      %877 = vmatprep.subr.bf16.mxu0 0
      %878 = vmatpush1.bf16.msra.mxu0 0
      %879 = vmatprep.subr.bf16.mxu0 0
      %880 = vmatpush1.bf16.msra.mxu0 0
      %881 = vmatprep.subr.bf16.mxu0 0
      %882 = vmatpush1.bf16.msra.mxu0 0
      %883 = vmatprep.subr.bf16.mxu0 0
      %884 = vmatpush1.bf16.msra.mxu0 0
      %885 = vmatprep.subr.bf16.mxu0 0
      %886 = vmatpush1.bf16.msra.mxu0 0
      %887 = vmatprep.subr.bf16.mxu0 0
      %888 = vmatpush1.bf16.msra.mxu0 0
      %889 = vmatprep.subr.bf16.mxu0 0
      %890 = vmatpush1.bf16.msra.mxu0 0
      %891 = vmatprep.subr.bf16.mxu0 0
      %892 = vmatpush1.bf16.msra.mxu0 0
      %893 = vmatprep.subr.bf16.mxu0 0
      %894 = vmatpush1.bf16.msra.mxu0 0
      %895 = vmatprep.mubr.bf16.mxu0 0
      %896 = vmatmul.mubr.bf16.gmra.mrb[0].mxu0 %v851
      %v897 = vpop.f32.mrb[0].mxu0
      %v898 = vadd.f32 0.0, %v897
      %v899 = vpop.f32.mrb[0].mxu0
      %v900 = vadd.f32 0.0, %v899
      %v901 = vpop.f32.mrb[0].mxu0
      %v902 = vadd.f32 0.0, %v901
      %v903 = vpop.f32.mrb[0].mxu0
      %v904 = vadd.f32 0.0, %v903
      %905 = vdwg.mxu0
      %906 = vxpose.xlu0.c.b16.start [1/8] %v759, 128
      %907 = vxpose.xlu0.c.b16.cont [2/8] %v760, 128
      %908 = vxpose.xlu0.c.b16.cont [3/8] %v761, 128
      %909 = vxpose.xlu0.c.b16.cont [4/8] %v762, 128
      %910 = vxpose.xlu0.c.b16.cont [5/8] 0, 128
      %911 = vxpose.xlu0.c.b16.cont [6/8] 0, 128
      %912 = vxpose.xlu0.c.b16.cont [7/8] 0, 128
      %913 = vxpose.xlu0.c.b16.end [8/8] 0, 128
      %v914 = vpop.trf.xlu0
      %v915 = vpop.trf.xlu0
      %v916 = vpop.trf.xlu0
      %v917 = vpop.trf.xlu0
      %v918 = vpop.trf.xlu0
      %v919 = vpop.trf.xlu0
      %v920 = vpop.trf.xlu0
      %v921 = vpop.trf.xlu0
      %v930 = vunpack.c.l.b16 %v763
      %v931 = vunpack.c.h.b16 %v763
      %v932 = vunpack.c.l.b16 %v764
      %v933 = vunpack.c.h.b16 %v764
      %v934 = vunpack.c.l.b16 %v765
      %v935 = vunpack.c.h.b16 %v765
      %v936 = vunpack.c.l.b16 %v766
      %v937 = vunpack.c.h.b16 %v766
      %v938 = vunpack.c.l.b16 %v767
      %v939 = vunpack.c.h.b16 %v767
      %v940 = vunpack.c.l.b16 %v768
      %v941 = vunpack.c.h.b16 %v768
      %v942 = vunpack.c.l.b16 %v769
      %v943 = vunpack.c.h.b16 %v769
      %v944 = vunpack.c.l.b16 %v770
      %v945 = vunpack.c.h.b16 %v770
      %v946 = vpack.c.b16 %v932, %v930
      %v947 = vpack.c.b16 %v933, %v931
      %v948 = vpack.c.b16 %v936, %v934
      %v949 = vpack.c.b16 %v937, %v935
      %v950 = vpack.c.b16 %v940, %v938
      %v951 = vpack.c.b16 %v941, %v939
      %v952 = vpack.c.b16 %v944, %v942
      %v953 = vpack.c.b16 %v945, %v943
      %v961 = vsel %vm404, %v914, 0
      %v964 = vand.u32 %v952, %v856
      %v967 = vand.u32 %v953, %v856
      %969 = vmatprep.subr.bf16.mxu0 %v947
      %970 = vmatpush1.bf16.msra.mxu0 %v946
      %971 = vmatprep.subr.bf16.mxu0 %v949
      %972 = vmatpush1.bf16.msra.mxu0 %v948
      %973 = vmatprep.subr.bf16.mxu0 %v951
      %974 = vmatpush1.bf16.msra.mxu0 %v950
      %975 = vmatprep.subr.bf16.mxu0 %v967
      %976 = vmatpush1.bf16.msra.mxu0 %v964
      %977 = vmatprep.subr.bf16.mxu0 0
      %978 = vmatpush1.bf16.msra.mxu0 0
      %979 = vmatprep.subr.bf16.mxu0 0
      %980 = vmatpush1.bf16.msra.mxu0 0
      %981 = vmatprep.subr.bf16.mxu0 0
      %982 = vmatpush1.bf16.msra.mxu0 0
      %983 = vmatprep.subr.bf16.mxu0 0
      %984 = vmatpush1.bf16.msra.mxu0 0
      %985 = vmatprep.subr.bf16.mxu0 0
      %986 = vmatpush1.bf16.msra.mxu0 0
      %987 = vmatprep.subr.bf16.mxu0 0
      %988 = vmatpush1.bf16.msra.mxu0 0
      %989 = vmatprep.subr.bf16.mxu0 0
      %990 = vmatpush1.bf16.msra.mxu0 0
      %991 = vmatprep.subr.bf16.mxu0 0
      %992 = vmatpush1.bf16.msra.mxu0 0
      %993 = vmatprep.subr.bf16.mxu0 0
      %994 = vmatpush1.bf16.msra.mxu0 0
      %995 = vmatprep.subr.bf16.mxu0 0
      %996 = vmatpush1.bf16.msra.mxu0 0
      %997 = vmatprep.subr.bf16.mxu0 0
      %998 = vmatpush1.bf16.msra.mxu0 0
      %999 = vmatprep.subr.bf16.mxu0 0
      %1000 = vmatpush1.bf16.msra.mxu0 0
      %1001 = vmatprep.mubr.bf16.mxu0 0
      %1002 = vmatmul.mubr.bf16.gmra.mrb[0].mxu0 %v961
      %v1003 = vpop.f32.mrb[0].mxu0
      %v1004 = vadd.f32 %v898, %v1003
      %v1005 = vpop.f32.mrb[0].mxu0
      %v1006 = vadd.f32 %v900, %v1005
      %v1007 = vpop.f32.mrb[0].mxu0
      %v1008 = vadd.f32 %v902, %v1007
      %v1009 = vpop.f32.mrb[0].mxu0
      %v1010 = vadd.f32 %v904, %v1009
      %1011 = vdwg.mxu0
      %s1012 = scalar_lea.vmem %s3, 128
      %v1013 = vld [vmem:[%s1012] sm:$0xff]
      %v1014 = vld [vmem:[%s1012 + $0x8] sm:$0xff]
      %v1015 = vld [vmem:[%s1012 + $0x10] sm:$0xff]
      %v1016 = vld [vmem:[%s1012 + $0x18] sm:$0xff]
      %v1017 = vld [vmem:[%s1012 + $0x20] sm:$0xff]
      %v1018 = vld [vmem:[%s1012 + $0x28] sm:$0xff]
      %v1019 = vld [vmem:[%s1012 + $0x30] sm:$0xff]
      %v1020 = vld [vmem:[%s1012 + $0x38] sm:$0x11]
      %1021 = vrot.lane.b32.xlu0 %v759, 96
      %v1022 = vpop.permute.xlu0 %1021
      %1023 = vrot.lane.b32.xlu0 %v760, 96
      %v1024 = vpop.permute.xlu0 %1023
      %1025 = vrot.lane.b32.xlu0 %v761, 96
      %v1026 = vpop.permute.xlu0 %1025
      %1027 = vrot.lane.b32.xlu0 %v762, 96
      %v1028 = vpop.permute.xlu0 %1027
      %1033 = vxpose.xlu0.c.b16.start [1/8] %v1022, 128
      %1034 = vxpose.xlu0.c.b16.cont [2/8] %v1024, 128
      %1035 = vxpose.xlu0.c.b16.cont [3/8] %v1026, 128
      %1036 = vxpose.xlu0.c.b16.cont [4/8] %v1028, 128
      %1037 = vxpose.xlu0.c.b16.cont [5/8] 0, 128
      %1038 = vxpose.xlu0.c.b16.cont [6/8] 0, 128
      %1039 = vxpose.xlu0.c.b16.cont [7/8] 0, 128
      %1040 = vxpose.xlu0.c.b16.end [8/8] 0, 128
      %v1041 = vpop.trf.xlu0
      %v1042 = vpop.trf.xlu0
      %v1043 = vpop.trf.xlu0
      %v1044 = vpop.trf.xlu0
      %v1045 = vpop.trf.xlu0
      %v1046 = vpop.trf.xlu0
      %v1047 = vpop.trf.xlu0
      %v1048 = vpop.trf.xlu0
      %v1057 = vunpack.c.l.b16 %v1013
      %v1058 = vunpack.c.h.b16 %v1013
      %v1059 = vunpack.c.l.b16 %v1014
      %v1060 = vunpack.c.h.b16 %v1014
      %v1061 = vunpack.c.l.b16 %v1015
      %v1062 = vunpack.c.h.b16 %v1015
      %v1063 = vunpack.c.l.b16 %v1016
      %v1064 = vunpack.c.h.b16 %v1016
      %v1065 = vunpack.c.l.b16 %v1017
      %v1066 = vunpack.c.h.b16 %v1017
      %v1067 = vunpack.c.l.b16 %v1018
      %v1068 = vunpack.c.h.b16 %v1018
      %v1069 = vunpack.c.l.b16 %v1019
      %v1070 = vunpack.c.h.b16 %v1019
      %v1071 = vunpack.c.l.b16 %v1020
      %v1072 = vunpack.c.h.b16 %v1020
      %v1073 = vpack.c.b16 %v1059, %v1057
      %v1074 = vpack.c.b16 %v1060, %v1058
      %v1075 = vpack.c.b16 %v1063, %v1061
      %v1076 = vpack.c.b16 %v1064, %v1062
      %v1077 = vpack.c.b16 %v1067, %v1065
      %v1078 = vpack.c.b16 %v1068, %v1066
      %v1079 = vpack.c.b16 %v1071, %v1069
      %v1080 = vpack.c.b16 %v1072, %v1070
      %v1088 = vsel %vm404, %v1041, 0
      %v1091 = vand.u32 %v1079, %v856
      %v1094 = vand.u32 %v1080, %v856
      %1096 = vmatprep.subr.bf16.mxu0 %v1074
      %1097 = vmatpush1.bf16.msra.mxu0 %v1073
      %1098 = vmatprep.subr.bf16.mxu0 %v1076
      %1099 = vmatpush1.bf16.msra.mxu0 %v1075
      %1100 = vmatprep.subr.bf16.mxu0 %v1078
      %1101 = vmatpush1.bf16.msra.mxu0 %v1077
      %1102 = vmatprep.subr.bf16.mxu0 %v1094
      %1103 = vmatpush1.bf16.msra.mxu0 %v1091
      %1104 = vmatprep.subr.bf16.mxu0 0
      %1105 = vmatpush1.bf16.msra.mxu0 0
      %1106 = vmatprep.subr.bf16.mxu0 0
      %1107 = vmatpush1.bf16.msra.mxu0 0
      %1108 = vmatprep.subr.bf16.mxu0 0
      %1109 = vmatpush1.bf16.msra.mxu0 0
      %1110 = vmatprep.subr.bf16.mxu0 0
      %1111 = vmatpush1.bf16.msra.mxu0 0
      %1112 = vmatprep.subr.bf16.mxu0 0
      %1113 = vmatpush1.bf16.msra.mxu0 0
      %1114 = vmatprep.subr.bf16.mxu0 0
      %1115 = vmatpush1.bf16.msra.mxu0 0
      %1116 = vmatprep.subr.bf16.mxu0 0
      %1117 = vmatpush1.bf16.msra.mxu0 0
      %1118 = vmatprep.subr.bf16.mxu0 0
      %1119 = vmatpush1.bf16.msra.mxu0 0
      %1120 = vmatprep.subr.bf16.mxu0 0
      %1121 = vmatpush1.bf16.msra.mxu0 0
      %1122 = vmatprep.subr.bf16.mxu0 0
      %1123 = vmatpush1.bf16.msra.mxu0 0
      %1124 = vmatprep.subr.bf16.mxu0 0
      %1125 = vmatpush1.bf16.msra.mxu0 0
      %1126 = vmatprep.subr.bf16.mxu0 0
      %1127 = vmatpush1.bf16.msra.mxu0 0
      %1128 = vmatprep.mubr.bf16.mxu0 0
      %1129 = vmatmul.mubr.bf16.gmra.mrb[0].mxu0 %v1088
      %v1130 = vpop.f32.mrb[0].mxu0
      %v1131 = vadd.f32 0.0, %v1130
      %v1132 = vpop.f32.mrb[0].mxu0
      %v1133 = vadd.f32 0.0, %v1132
      %v1134 = vpop.f32.mrb[0].mxu0
      %v1135 = vadd.f32 0.0, %v1134
      %v1136 = vpop.f32.mrb[0].mxu0
      %v1137 = vadd.f32 0.0, %v1136
      %1138 = vdwg.mxu0
      %v1139 = vadd.f32 %v1004, %v1131
      %v1140 = vadd.f32 %v1006, %v1133
      %v1141 = vadd.f32 %v1008, %v1135
      %v1142 = vadd.f32 %v1010, %v1137
      %s1143 = scalar_lea.vmem %s3, 192
      %v1144 = vld [vmem:[%s1143] sm:$0xff]
      %v1145 = vld [vmem:[%s1143 + $0x8] sm:$0xff]
      %v1146 = vld [vmem:[%s1143 + $0x10] sm:$0xff]
      %v1147 = vld [vmem:[%s1143 + $0x18] sm:$0xff]
      %v1148 = vld [vmem:[%s1143 + $0x20] sm:$0xff]
      %v1149 = vld [vmem:[%s1143 + $0x28] sm:$0xff]
      %v1150 = vld [vmem:[%s1143 + $0x30] sm:$0xff]
      %v1151 = vld [vmem:[%s1143 + $0x38] sm:$0x11]
      %1152 = vrot.lane.b32.xlu0 %v759, 80
      %v1153 = vpop.permute.xlu0 %1152
      %1154 = vrot.lane.b32.xlu0 %v760, 80
      %v1155 = vpop.permute.xlu0 %1154
      %1156 = vrot.lane.b32.xlu0 %v761, 80
      %v1157 = vpop.permute.xlu0 %1156
      %1158 = vrot.lane.b32.xlu0 %v762, 80
      %v1159 = vpop.permute.xlu0 %1158
      %1164 = vxpose.xlu0.c.b16.start [1/8] %v1153, 128
      %1165 = vxpose.xlu0.c.b16.cont [2/8] %v1155, 128
      %1166 = vxpose.xlu0.c.b16.cont [3/8] %v1157, 128
      %1167 = vxpose.xlu0.c.b16.cont [4/8] %v1159, 128
      %1168 = vxpose.xlu0.c.b16.cont [5/8] 0, 128
      %1169 = vxpose.xlu0.c.b16.cont [6/8] 0, 128
      %1170 = vxpose.xlu0.c.b16.cont [7/8] 0, 128
      %1171 = vxpose.xlu0.c.b16.end [8/8] 0, 128
      %v1172 = vpop.trf.xlu0
      %v1173 = vpop.trf.xlu0
      %v1174 = vpop.trf.xlu0
      %v1175 = vpop.trf.xlu0
      %v1176 = vpop.trf.xlu0
      %v1177 = vpop.trf.xlu0
      %v1178 = vpop.trf.xlu0
      %v1179 = vpop.trf.xlu0
      %v1188 = vunpack.c.l.b16 %v1144
      %v1189 = vunpack.c.h.b16 %v1144
      %v1190 = vunpack.c.l.b16 %v1145
      %v1191 = vunpack.c.h.b16 %v1145
      %v1192 = vunpack.c.l.b16 %v1146
      %v1193 = vunpack.c.h.b16 %v1146
      %v1194 = vunpack.c.l.b16 %v1147
      %v1195 = vunpack.c.h.b16 %v1147
      %v1196 = vunpack.c.l.b16 %v1148
      %v1197 = vunpack.c.h.b16 %v1148
      %v1198 = vunpack.c.l.b16 %v1149
      %v1199 = vunpack.c.h.b16 %v1149
      %v1200 = vunpack.c.l.b16 %v1150
      %v1201 = vunpack.c.h.b16 %v1150
      %v1202 = vunpack.c.l.b16 %v1151
      %v1203 = vunpack.c.h.b16 %v1151
      %v1204 = vpack.c.b16 %v1190, %v1188
      %v1205 = vpack.c.b16 %v1191, %v1189
      %v1206 = vpack.c.b16 %v1194, %v1192
      %v1207 = vpack.c.b16 %v1195, %v1193
      %v1208 = vpack.c.b16 %v1198, %v1196
      %v1209 = vpack.c.b16 %v1199, %v1197
      %v1210 = vpack.c.b16 %v1202, %v1200
      %v1211 = vpack.c.b16 %v1203, %v1201
      %v1219 = vsel %vm404, %v1172, 0
      %v1222 = vand.u32 %v1210, %v856
      %v1225 = vand.u32 %v1211, %v856
      %1227 = vmatprep.subr.bf16.mxu0 %v1205
      %1228 = vmatpush1.bf16.msra.mxu0 %v1204
      %1229 = vmatprep.subr.bf16.mxu0 %v1207
      %1230 = vmatpush1.bf16.msra.mxu0 %v1206
      %1231 = vmatprep.subr.bf16.mxu0 %v1209
      %1232 = vmatpush1.bf16.msra.mxu0 %v1208
      %1233 = vmatprep.subr.bf16.mxu0 %v1225
      %1234 = vmatpush1.bf16.msra.mxu0 %v1222
      %1235 = vmatprep.subr.bf16.mxu0 0
      %1236 = vmatpush1.bf16.msra.mxu0 0
      %1237 = vmatprep.subr.bf16.mxu0 0
      %1238 = vmatpush1.bf16.msra.mxu0 0
      %1239 = vmatprep.subr.bf16.mxu0 0
      %1240 = vmatpush1.bf16.msra.mxu0 0
      %1241 = vmatprep.subr.bf16.mxu0 0
      %1242 = vmatpush1.bf16.msra.mxu0 0
      %1243 = vmatprep.subr.bf16.mxu0 0
      %1244 = vmatpush1.bf16.msra.mxu0 0
      %1245 = vmatprep.subr.bf16.mxu0 0
      %1246 = vmatpush1.bf16.msra.mxu0 0
      %1247 = vmatprep.subr.bf16.mxu0 0
      %1248 = vmatpush1.bf16.msra.mxu0 0
      %1249 = vmatprep.subr.bf16.mxu0 0
      %1250 = vmatpush1.bf16.msra.mxu0 0
      %1251 = vmatprep.subr.bf16.mxu0 0
      %1252 = vmatpush1.bf16.msra.mxu0 0
      %1253 = vmatprep.subr.bf16.mxu0 0
      %1254 = vmatpush1.bf16.msra.mxu0 0
      %1255 = vmatprep.subr.bf16.mxu0 0
      %1256 = vmatpush1.bf16.msra.mxu0 0
      %1257 = vmatprep.subr.bf16.mxu0 0
      %1258 = vmatpush1.bf16.msra.mxu0 0
      %1259 = vmatprep.mubr.bf16.mxu0 0
      %1260 = vmatmul.mubr.bf16.gmra.mrb[0].mxu0 %v1219
      %v1261 = vpop.f32.mrb[0].mxu0
      %v1262 = vadd.f32 0.0, %v1261
      %v1263 = vpop.f32.mrb[0].mxu0
      %v1264 = vadd.f32 0.0, %v1263
      %v1265 = vpop.f32.mrb[0].mxu0
      %v1266 = vadd.f32 0.0, %v1265
      %v1267 = vpop.f32.mrb[0].mxu0
      %v1268 = vadd.f32 0.0, %v1267
      %1269 = vdwg.mxu0
      %v1270 = vadd.f32 %v1139, %v1262
      %v1271 = vadd.f32 %v1140, %v1264
      %v1272 = vadd.f32 %v1141, %v1266
      %v1273 = vadd.f32 %v1142, %v1268
      %s1274 = scalar_lea.vmem %s3, 256
      %v1275 = vld [vmem:[%s1274] sm:$0xff]
      %v1276 = vld [vmem:[%s1274 + $0x8] sm:$0xff]
      %v1277 = vld [vmem:[%s1274 + $0x10] sm:$0xff]
      %v1278 = vld [vmem:[%s1274 + $0x18] sm:$0xff]
      %v1279 = vld [vmem:[%s1274 + $0x20] sm:$0xff]
      %v1280 = vld [vmem:[%s1274 + $0x28] sm:$0xff]
      %v1281 = vld [vmem:[%s1274 + $0x30] sm:$0xff]
      %v1282 = vld [vmem:[%s1274 + $0x38] sm:$0x11]
      %1283 = vrot.lane.b32.xlu0 %v759, 64
      %v1284 = vpop.permute.xlu0 %1283
      %1285 = vrot.lane.b32.xlu0 %v760, 64
      %v1286 = vpop.permute.xlu0 %1285
      %1287 = vrot.lane.b32.xlu0 %v761, 64
      %v1288 = vpop.permute.xlu0 %1287
      %1289 = vrot.lane.b32.xlu0 %v762, 64
      %v1290 = vpop.permute.xlu0 %1289
      %1295 = vxpose.xlu0.c.b16.start [1/8] %v1284, 128
      %1296 = vxpose.xlu0.c.b16.cont [2/8] %v1286, 128
      %1297 = vxpose.xlu0.c.b16.cont [3/8] %v1288, 128
      %1298 = vxpose.xlu0.c.b16.cont [4/8] %v1290, 128
      %1299 = vxpose.xlu0.c.b16.cont [5/8] 0, 128
      %1300 = vxpose.xlu0.c.b16.cont [6/8] 0, 128
      %1301 = vxpose.xlu0.c.b16.cont [7/8] 0, 128
      %1302 = vxpose.xlu0.c.b16.end [8/8] 0, 128
      %v1303 = vpop.trf.xlu0
      %v1304 = vpop.trf.xlu0
      %v1305 = vpop.trf.xlu0
      %v1306 = vpop.trf.xlu0
      %v1307 = vpop.trf.xlu0
      %v1308 = vpop.trf.xlu0
      %v1309 = vpop.trf.xlu0
      %v1310 = vpop.trf.xlu0
      %v1319 = vunpack.c.l.b16 %v1275
      %v1320 = vunpack.c.h.b16 %v1275
      %v1321 = vunpack.c.l.b16 %v1276
      %v1322 = vunpack.c.h.b16 %v1276
      %v1323 = vunpack.c.l.b16 %v1277
      %v1324 = vunpack.c.h.b16 %v1277
      %v1325 = vunpack.c.l.b16 %v1278
      %v1326 = vunpack.c.h.b16 %v1278
      %v1327 = vunpack.c.l.b16 %v1279
      %v1328 = vunpack.c.h.b16 %v1279
      %v1329 = vunpack.c.l.b16 %v1280
      %v1330 = vunpack.c.h.b16 %v1280
      %v1331 = vunpack.c.l.b16 %v1281
      %v1332 = vunpack.c.h.b16 %v1281
      %v1333 = vunpack.c.l.b16 %v1282
      %v1334 = vunpack.c.h.b16 %v1282
      %v1335 = vpack.c.b16 %v1321, %v1319
      %v1336 = vpack.c.b16 %v1322, %v1320
      %v1337 = vpack.c.b16 %v1325, %v1323
      %v1338 = vpack.c.b16 %v1326, %v1324
      %v1339 = vpack.c.b16 %v1329, %v1327
      %v1340 = vpack.c.b16 %v1330, %v1328
      %v1341 = vpack.c.b16 %v1333, %v1331
      %v1342 = vpack.c.b16 %v1334, %v1332
      %v1350 = vsel %vm404, %v1303, 0
      %v1353 = vand.u32 %v1341, %v856
      %v1356 = vand.u32 %v1342, %v856
      %1358 = vmatprep.subr.bf16.mxu0 %v1336
      %1359 = vmatpush1.bf16.msra.mxu0 %v1335
      %1360 = vmatprep.subr.bf16.mxu0 %v1338
      %1361 = vmatpush1.bf16.msra.mxu0 %v1337
      %1362 = vmatprep.subr.bf16.mxu0 %v1340
      %1363 = vmatpush1.bf16.msra.mxu0 %v1339
      %1364 = vmatprep.subr.bf16.mxu0 %v1356
      %1365 = vmatpush1.bf16.msra.mxu0 %v1353
      %1366 = vmatprep.subr.bf16.mxu0 0
      %1367 = vmatpush1.bf16.msra.mxu0 0
      %1368 = vmatprep.subr.bf16.mxu0 0
      %1369 = vmatpush1.bf16.msra.mxu0 0
      %1370 = vmatprep.subr.bf16.mxu0 0
      %1371 = vmatpush1.bf16.msra.mxu0 0
      %1372 = vmatprep.subr.bf16.mxu0 0
      %1373 = vmatpush1.bf16.msra.mxu0 0
      %1374 = vmatprep.subr.bf16.mxu0 0
      %1375 = vmatpush1.bf16.msra.mxu0 0
      %1376 = vmatprep.subr.bf16.mxu0 0
      %1377 = vmatpush1.bf16.msra.mxu0 0
      %1378 = vmatprep.subr.bf16.mxu0 0
      %1379 = vmatpush1.bf16.msra.mxu0 0
      %1380 = vmatprep.subr.bf16.mxu0 0
      %1381 = vmatpush1.bf16.msra.mxu0 0
      %1382 = vmatprep.subr.bf16.mxu0 0
      %1383 = vmatpush1.bf16.msra.mxu0 0
      %1384 = vmatprep.subr.bf16.mxu0 0
      %1385 = vmatpush1.bf16.msra.mxu0 0
      %1386 = vmatprep.subr.bf16.mxu0 0
      %1387 = vmatpush1.bf16.msra.mxu0 0
      %1388 = vmatprep.subr.bf16.mxu0 0
      %1389 = vmatpush1.bf16.msra.mxu0 0
      %1390 = vmatprep.mubr.bf16.mxu0 0
      %1391 = vmatmul.mubr.bf16.gmra.mrb[0].mxu0 %v1350
      %v1392 = vpop.f32.mrb[0].mxu0
      %v1393 = vadd.f32 0.0, %v1392
      %v1394 = vpop.f32.mrb[0].mxu0
      %v1395 = vadd.f32 0.0, %v1394
      %v1396 = vpop.f32.mrb[0].mxu0
      %v1397 = vadd.f32 0.0, %v1396
      %v1398 = vpop.f32.mrb[0].mxu0
      %v1399 = vadd.f32 0.0, %v1398
      %1400 = vdwg.mxu0
      %v1401 = vadd.f32 %v1270, %v1393
      %v1402 = vadd.f32 %v1271, %v1395
      %v1403 = vadd.f32 %v1272, %v1397
      %v1404 = vadd.f32 %v1273, %v1399
      %s1405 = scalar_lea.vmem %s3, 320
      %v1406 = vld [vmem:[%s1405] sm:$0xff]
      %v1407 = vld [vmem:[%s1405 + $0x8] sm:$0xff]
      %v1408 = vld [vmem:[%s1405 + $0x10] sm:$0xff]
      %v1409 = vld [vmem:[%s1405 + $0x18] sm:$0xff]
      %v1410 = vld [vmem:[%s1405 + $0x20] sm:$0xff]
      %v1411 = vld [vmem:[%s1405 + $0x28] sm:$0xff]
      %v1412 = vld [vmem:[%s1405 + $0x30] sm:$0xff]
      %v1413 = vld [vmem:[%s1405 + $0x38] sm:$0x11]
      %1414 = vrot.lane.b32.xlu0 %v759, 48
      %v1415 = vpop.permute.xlu0 %1414
      %1416 = vrot.lane.b32.xlu0 %v760, 48
      %v1417 = vpop.permute.xlu0 %1416
      %1418 = vrot.lane.b32.xlu0 %v761, 48
      %v1419 = vpop.permute.xlu0 %1418
      %1420 = vrot.lane.b32.xlu0 %v762, 48
      %v1421 = vpop.permute.xlu0 %1420
      %1426 = vxpose.xlu0.c.b16.start [1/8] %v1415, 128
      %1427 = vxpose.xlu0.c.b16.cont [2/8] %v1417, 128
      %1428 = vxpose.xlu0.c.b16.cont [3/8] %v1419, 128
      %1429 = vxpose.xlu0.c.b16.cont [4/8] %v1421, 128
      %1430 = vxpose.xlu0.c.b16.cont [5/8] 0, 128
      %1431 = vxpose.xlu0.c.b16.cont [6/8] 0, 128
      %1432 = vxpose.xlu0.c.b16.cont [7/8] 0, 128
      %1433 = vxpose.xlu0.c.b16.end [8/8] 0, 128
      %v1434 = vpop.trf.xlu0
      %v1435 = vpop.trf.xlu0
      %v1436 = vpop.trf.xlu0
      %v1437 = vpop.trf.xlu0
      %v1438 = vpop.trf.xlu0
      %v1439 = vpop.trf.xlu0
      %v1440 = vpop.trf.xlu0
      %v1441 = vpop.trf.xlu0
      %v1450 = vunpack.c.l.b16 %v1406
      %v1451 = vunpack.c.h.b16 %v1406
      %v1452 = vunpack.c.l.b16 %v1407
      %v1453 = vunpack.c.h.b16 %v1407
      %v1454 = vunpack.c.l.b16 %v1408
      %v1455 = vunpack.c.h.b16 %v1408
      %v1456 = vunpack.c.l.b16 %v1409
      %v1457 = vunpack.c.h.b16 %v1409
      %v1458 = vunpack.c.l.b16 %v1410
      %v1459 = vunpack.c.h.b16 %v1410
      %v1460 = vunpack.c.l.b16 %v1411
      %v1461 = vunpack.c.h.b16 %v1411
      %v1462 = vunpack.c.l.b16 %v1412
      %v1463 = vunpack.c.h.b16 %v1412
      %v1464 = vunpack.c.l.b16 %v1413
      %v1465 = vunpack.c.h.b16 %v1413
      %v1466 = vpack.c.b16 %v1452, %v1450
      %v1467 = vpack.c.b16 %v1453, %v1451
      %v1468 = vpack.c.b16 %v1456, %v1454
      %v1469 = vpack.c.b16 %v1457, %v1455
      %v1470 = vpack.c.b16 %v1460, %v1458
      %v1471 = vpack.c.b16 %v1461, %v1459
      %v1472 = vpack.c.b16 %v1464, %v1462
      %v1473 = vpack.c.b16 %v1465, %v1463
      %v1481 = vsel %vm404, %v1434, 0
      %v1484 = vand.u32 %v1472, %v856
      %v1487 = vand.u32 %v1473, %v856
      %1489 = vmatprep.subr.bf16.mxu0 %v1467
      %1490 = vmatpush1.bf16.msra.mxu0 %v1466
      %1491 = vmatprep.subr.bf16.mxu0 %v1469
      %1492 = vmatpush1.bf16.msra.mxu0 %v1468
      %1493 = vmatprep.subr.bf16.mxu0 %v1471
      %1494 = vmatpush1.bf16.msra.mxu0 %v1470
      %1495 = vmatprep.subr.bf16.mxu0 %v1487
      %1496 = vmatpush1.bf16.msra.mxu0 %v1484
      %1497 = vmatprep.subr.bf16.mxu0 0
      %1498 = vmatpush1.bf16.msra.mxu0 0
      %1499 = vmatprep.subr.bf16.mxu0 0
      %1500 = vmatpush1.bf16.msra.mxu0 0
      %1501 = vmatprep.subr.bf16.mxu0 0
      %1502 = vmatpush1.bf16.msra.mxu0 0
      %1503 = vmatprep.subr.bf16.mxu0 0
      %1504 = vmatpush1.bf16.msra.mxu0 0
      %1505 = vmatprep.subr.bf16.mxu0 0
      %1506 = vmatpush1.bf16.msra.mxu0 0
      %1507 = vmatprep.subr.bf16.mxu0 0
      %1508 = vmatpush1.bf16.msra.mxu0 0
      %1509 = vmatprep.subr.bf16.mxu0 0
      %1510 = vmatpush1.bf16.msra.mxu0 0
      %1511 = vmatprep.subr.bf16.mxu0 0
      %1512 = vmatpush1.bf16.msra.mxu0 0
      %1513 = vmatprep.subr.bf16.mxu0 0
      %1514 = vmatpush1.bf16.msra.mxu0 0
      %1515 = vmatprep.subr.bf16.mxu0 0
      %1516 = vmatpush1.bf16.msra.mxu0 0
      %1517 = vmatprep.subr.bf16.mxu0 0
      %1518 = vmatpush1.bf16.msra.mxu0 0
      %1519 = vmatprep.subr.bf16.mxu0 0
      %1520 = vmatpush1.bf16.msra.mxu0 0
      %1521 = vmatprep.mubr.bf16.mxu0 0
      %1522 = vmatmul.mubr.bf16.gmra.mrb[0].mxu0 %v1481
      %v1523 = vpop.f32.mrb[0].mxu0
      %v1524 = vadd.f32 0.0, %v1523
      %v1525 = vpop.f32.mrb[0].mxu0
      %v1526 = vadd.f32 0.0, %v1525
      %v1527 = vpop.f32.mrb[0].mxu0
      %v1528 = vadd.f32 0.0, %v1527
      %v1529 = vpop.f32.mrb[0].mxu0
      %v1530 = vadd.f32 0.0, %v1529
      %1531 = vdwg.mxu0
      %v1532 = vadd.f32 %v1401, %v1524
      %v1533 = vadd.f32 %v1402, %v1526
      %v1534 = vadd.f32 %v1403, %v1528
      %v1535 = vadd.f32 %v1404, %v1530
      %s1536 = scalar_lea.vmem %s3, 384
      %v1537 = vld [vmem:[%s1536] sm:$0xff]
      %v1538 = vld [vmem:[%s1536 + $0x8] sm:$0xff]
      %v1539 = vld [vmem:[%s1536 + $0x10] sm:$0xff]
      %v1540 = vld [vmem:[%s1536 + $0x18] sm:$0xff]
      %v1541 = vld [vmem:[%s1536 + $0x20] sm:$0xff]
      %v1542 = vld [vmem:[%s1536 + $0x28] sm:$0xff]
      %v1543 = vld [vmem:[%s1536 + $0x30] sm:$0xff]
      %v1544 = vld [vmem:[%s1536 + $0x38] sm:$0x11]
      %1545 = vrot.lane.b32.xlu0 %v759, 32
      %v1546 = vpop.permute.xlu0 %1545
      %1547 = vrot.lane.b32.xlu0 %v760, 32
      %v1548 = vpop.permute.xlu0 %1547
      %1549 = vrot.lane.b32.xlu0 %v761, 32
      %v1550 = vpop.permute.xlu0 %1549
      %1551 = vrot.lane.b32.xlu0 %v762, 32
      %v1552 = vpop.permute.xlu0 %1551
      %1557 = vxpose.xlu0.c.b16.start [1/8] %v1546, 128
      %1558 = vxpose.xlu0.c.b16.cont [2/8] %v1548, 128
      %1559 = vxpose.xlu0.c.b16.cont [3/8] %v1550, 128
      %1560 = vxpose.xlu0.c.b16.cont [4/8] %v1552, 128
      %1561 = vxpose.xlu0.c.b16.cont [5/8] 0, 128
      %1562 = vxpose.xlu0.c.b16.cont [6/8] 0, 128
      %1563 = vxpose.xlu0.c.b16.cont [7/8] 0, 128
      %1564 = vxpose.xlu0.c.b16.end [8/8] 0, 128
      %v1565 = vpop.trf.xlu0
      %v1566 = vpop.trf.xlu0
      %v1567 = vpop.trf.xlu0
      %v1568 = vpop.trf.xlu0
      %v1569 = vpop.trf.xlu0
      %v1570 = vpop.trf.xlu0
      %v1571 = vpop.trf.xlu0
      %v1572 = vpop.trf.xlu0
      %v1581 = vunpack.c.l.b16 %v1537
      %v1582 = vunpack.c.h.b16 %v1537
      %v1583 = vunpack.c.l.b16 %v1538
      %v1584 = vunpack.c.h.b16 %v1538
      %v1585 = vunpack.c.l.b16 %v1539
      %v1586 = vunpack.c.h.b16 %v1539
      %v1587 = vunpack.c.l.b16 %v1540
      %v1588 = vunpack.c.h.b16 %v1540
      %v1589 = vunpack.c.l.b16 %v1541
      %v1590 = vunpack.c.h.b16 %v1541
      %v1591 = vunpack.c.l.b16 %v1542
      %v1592 = vunpack.c.h.b16 %v1542
      %v1593 = vunpack.c.l.b16 %v1543
      %v1594 = vunpack.c.h.b16 %v1543
      %v1595 = vunpack.c.l.b16 %v1544
      %v1596 = vunpack.c.h.b16 %v1544
      %v1597 = vpack.c.b16 %v1583, %v1581
      %v1598 = vpack.c.b16 %v1584, %v1582
      %v1599 = vpack.c.b16 %v1587, %v1585
      %v1600 = vpack.c.b16 %v1588, %v1586
      %v1601 = vpack.c.b16 %v1591, %v1589
      %v1602 = vpack.c.b16 %v1592, %v1590
      %v1603 = vpack.c.b16 %v1595, %v1593
      %v1604 = vpack.c.b16 %v1596, %v1594
      %v1612 = vsel %vm404, %v1565, 0
      %v1615 = vand.u32 %v1603, %v856
      %v1618 = vand.u32 %v1604, %v856
      %1620 = vmatprep.subr.bf16.mxu0 %v1598
      %1621 = vmatpush1.bf16.msra.mxu0 %v1597
      %1622 = vmatprep.subr.bf16.mxu0 %v1600
      %1623 = vmatpush1.bf16.msra.mxu0 %v1599
      %1624 = vmatprep.subr.bf16.mxu0 %v1602
      %1625 = vmatpush1.bf16.msra.mxu0 %v1601
      %1626 = vmatprep.subr.bf16.mxu0 %v1618
      %1627 = vmatpush1.bf16.msra.mxu0 %v1615
      %1628 = vmatprep.subr.bf16.mxu0 0
      %1629 = vmatpush1.bf16.msra.mxu0 0
      %1630 = vmatprep.subr.bf16.mxu0 0
      %1631 = vmatpush1.bf16.msra.mxu0 0
      %1632 = vmatprep.subr.bf16.mxu0 0
      %1633 = vmatpush1.bf16.msra.mxu0 0
      %1634 = vmatprep.subr.bf16.mxu0 0
      %1635 = vmatpush1.bf16.msra.mxu0 0
      %1636 = vmatprep.subr.bf16.mxu0 0
      %1637 = vmatpush1.bf16.msra.mxu0 0
      %1638 = vmatprep.subr.bf16.mxu0 0
      %1639 = vmatpush1.bf16.msra.mxu0 0
      %1640 = vmatprep.subr.bf16.mxu0 0
      %1641 = vmatpush1.bf16.msra.mxu0 0
      %1642 = vmatprep.subr.bf16.mxu0 0
      %1643 = vmatpush1.bf16.msra.mxu0 0
      %1644 = vmatprep.subr.bf16.mxu0 0
      %1645 = vmatpush1.bf16.msra.mxu0 0
      %1646 = vmatprep.subr.bf16.mxu0 0
      %1647 = vmatpush1.bf16.msra.mxu0 0
      %1648 = vmatprep.subr.bf16.mxu0 0
      %1649 = vmatpush1.bf16.msra.mxu0 0
      %1650 = vmatprep.subr.bf16.mxu0 0
      %1651 = vmatpush1.bf16.msra.mxu0 0
      %1652 = vmatprep.mubr.bf16.mxu0 0
      %1653 = vmatmul.mubr.bf16.gmra.mrb[0].mxu0 %v1612
      %v1654 = vpop.f32.mrb[0].mxu0
      %v1655 = vadd.f32 0.0, %v1654
      %v1656 = vpop.f32.mrb[0].mxu0
      %v1657 = vadd.f32 0.0, %v1656
      %v1658 = vpop.f32.mrb[0].mxu0
      %v1659 = vadd.f32 0.0, %v1658
      %v1660 = vpop.f32.mrb[0].mxu0
      %v1661 = vadd.f32 0.0, %v1660
      %1662 = vdwg.mxu0
      %v1663 = vadd.f32 %v1532, %v1655
      %v1664 = vadd.f32 %v1533, %v1657
      %v1665 = vadd.f32 %v1534, %v1659
      %v1666 = vadd.f32 %v1535, %v1661
      %s1667 = scalar_lea.vmem %s3, 448
      %v1668 = vld [vmem:[%s1667] sm:$0xff]
      %v1669 = vld [vmem:[%s1667 + $0x8] sm:$0xff]
      %v1670 = vld [vmem:[%s1667 + $0x10] sm:$0xff]
      %v1671 = vld [vmem:[%s1667 + $0x18] sm:$0xff]
      %v1672 = vld [vmem:[%s1667 + $0x20] sm:$0xff]
      %v1673 = vld [vmem:[%s1667 + $0x28] sm:$0xff]
      %v1674 = vld [vmem:[%s1667 + $0x30] sm:$0xff]
      %v1675 = vld [vmem:[%s1667 + $0x38] sm:$0x11]
      %1676 = vrot.lane.b32.xlu0 %v759, 16
      %v1677 = vpop.permute.xlu0 %1676
      %1678 = vrot.lane.b32.xlu0 %v760, 16
      %v1679 = vpop.permute.xlu0 %1678
      %1680 = vrot.lane.b32.xlu0 %v761, 16
      %v1681 = vpop.permute.xlu0 %1680
      %1682 = vrot.lane.b32.xlu0 %v762, 16
      %v1683 = vpop.permute.xlu0 %1682
      %1688 = vxpose.xlu0.c.b16.start [1/8] %v1677, 128
      %1689 = vxpose.xlu0.c.b16.cont [2/8] %v1679, 128
      %1690 = vxpose.xlu0.c.b16.cont [3/8] %v1681, 128
      %1691 = vxpose.xlu0.c.b16.cont [4/8] %v1683, 128
      %1692 = vxpose.xlu0.c.b16.cont [5/8] 0, 128
      %1693 = vxpose.xlu0.c.b16.cont [6/8] 0, 128
      %1694 = vxpose.xlu0.c.b16.cont [7/8] 0, 128
      %1695 = vxpose.xlu0.c.b16.end [8/8] 0, 128
      %v1696 = vpop.trf.xlu0
      %v1697 = vpop.trf.xlu0
      %v1698 = vpop.trf.xlu0
      %v1699 = vpop.trf.xlu0
      %v1700 = vpop.trf.xlu0
      %v1701 = vpop.trf.xlu0
      %v1702 = vpop.trf.xlu0
      %v1703 = vpop.trf.xlu0
      %v1712 = vunpack.c.l.b16 %v1668
      %v1713 = vunpack.c.h.b16 %v1668
      %v1714 = vunpack.c.l.b16 %v1669
      %v1715 = vunpack.c.h.b16 %v1669
      %v1716 = vunpack.c.l.b16 %v1670
      %v1717 = vunpack.c.h.b16 %v1670
      %v1718 = vunpack.c.l.b16 %v1671
      %v1719 = vunpack.c.h.b16 %v1671
      %v1720 = vunpack.c.l.b16 %v1672
      %v1721 = vunpack.c.h.b16 %v1672
      %v1722 = vunpack.c.l.b16 %v1673
      %v1723 = vunpack.c.h.b16 %v1673
      %v1724 = vunpack.c.l.b16 %v1674
      %v1725 = vunpack.c.h.b16 %v1674
      %v1726 = vunpack.c.l.b16 %v1675
      %v1727 = vunpack.c.h.b16 %v1675
      %v1728 = vpack.c.b16 %v1714, %v1712
      %v1729 = vpack.c.b16 %v1715, %v1713
      %v1730 = vpack.c.b16 %v1718, %v1716
      %v1731 = vpack.c.b16 %v1719, %v1717
      %v1732 = vpack.c.b16 %v1722, %v1720
      %v1733 = vpack.c.b16 %v1723, %v1721
      %v1734 = vpack.c.b16 %v1726, %v1724
      %v1735 = vpack.c.b16 %v1727, %v1725
      %v1743 = vsel %vm404, %v1696, 0
      %v1746 = vand.u32 %v1734, %v856
      %v1749 = vand.u32 %v1735, %v856
      %1751 = vmatprep.subr.bf16.mxu0 %v1729
      %1752 = vmatpush1.bf16.msra.mxu0 %v1728
      %1753 = vmatprep.subr.bf16.mxu0 %v1731
      %1754 = vmatpush1.bf16.msra.mxu0 %v1730
      %1755 = vmatprep.subr.bf16.mxu0 %v1733
      %1756 = vmatpush1.bf16.msra.mxu0 %v1732
      %1757 = vmatprep.subr.bf16.mxu0 %v1749
      %1758 = vmatpush1.bf16.msra.mxu0 %v1746
      %1759 = vmatprep.subr.bf16.mxu0 0
      %1760 = vmatpush1.bf16.msra.mxu0 0
      %1761 = vmatprep.subr.bf16.mxu0 0
      %1762 = vmatpush1.bf16.msra.mxu0 0
      %1763 = vmatprep.subr.bf16.mxu0 0
      %1764 = vmatpush1.bf16.msra.mxu0 0
      %1765 = vmatprep.subr.bf16.mxu0 0
      %1766 = vmatpush1.bf16.msra.mxu0 0
      %1767 = vmatprep.subr.bf16.mxu0 0
      %1768 = vmatpush1.bf16.msra.mxu0 0
      %1769 = vmatprep.subr.bf16.mxu0 0
      %1770 = vmatpush1.bf16.msra.mxu0 0
      %1771 = vmatprep.subr.bf16.mxu0 0
      %1772 = vmatpush1.bf16.msra.mxu0 0
      %1773 = vmatprep.subr.bf16.mxu0 0
      %1774 = vmatpush1.bf16.msra.mxu0 0
      %1775 = vmatprep.subr.bf16.mxu0 0
      %1776 = vmatpush1.bf16.msra.mxu0 0
      %1777 = vmatprep.subr.bf16.mxu0 0
      %1778 = vmatpush1.bf16.msra.mxu0 0
      %1779 = vmatprep.subr.bf16.mxu0 0
      %1780 = vmatpush1.bf16.msra.mxu0 0
      %1781 = vmatprep.subr.bf16.mxu0 0
      %1782 = vmatpush1.bf16.msra.mxu0 0
      %1783 = vmatprep.mubr.bf16.mxu0 0
      %1784 = vmatmul.mubr.bf16.gmra.mrb[0].mxu0 %v1743
      %v1785 = vpop.f32.mrb[0].mxu0
      %v1786 = vadd.f32 0.0, %v1785
      %v1787 = vpop.f32.mrb[0].mxu0
      %v1788 = vadd.f32 0.0, %v1787
      %v1789 = vpop.f32.mrb[0].mxu0
      %v1790 = vadd.f32 0.0, %v1789
      %v1791 = vpop.f32.mrb[0].mxu0
      %v1792 = vadd.f32 0.0, %v1791
      %1793 = vdwg.mxu0
      %v1794 = vadd.f32 %v1663, %v1786
      %v1795 = vadd.f32 %v1664, %v1788
      %v1796 = vadd.f32 %v1665, %v1790
      %v1797 = vadd.f32 %v1666, %v1792
      %v1799 = vlaneseq
      %v1800 = vshrl.u32 %v1799, 7
      %v1801 = vsub.s32 0, %v1800
      %v1802 = vrot.slane %v270, %v1801
      %v1803 = vlaneseq
      %v1804 = vshrl.u32 %v1803, 7
      %v1805 = vsub.s32 1, %v1804
      %v1806 = vrot.slane %v270, %v1805
      %v1809 = vadd.f32 %v1794, %v1802
      %v1810 = vadd.f32 %v1795, %v1806
      %v1811 = vadd.f32 %v1796, %v1802
      %v1812 = vadd.f32 %v1797, %v1806
      %v1813 = vmax.f32 %v1809, 0.0
      %v1814 = vmax.f32 %v1810, 0.0
      %v1815 = vmax.f32 %v1811, 0.0
      %v1816 = vmax.f32 %v1812, 0.0
      %vm1817 = vcmask 818176
      %v1819 = vsel %vm1817, %v1814, 0
      %v1822 = vsel %vm1817, %v1816, 0
      %v1825 = vsel %vm1817, %v273, 0
      %1827 = vmatprep.subr.mxu0 %v1825
      %1828 = vmatpush1.xpose.msra.mxu0 %v272
      %1829 = vmatprep.subr.mxu0 0.0
      %1830 = vmatpush1.xpose.msra.mxu0 0.0
      %1831 = vmatprep.subr.mxu0 0.0
      %1832 = vmatpush1.xpose.msra.mxu0 0.0
      %1833 = vmatprep.subr.mxu0 0.0
      %1834 = vmatpush1.xpose.msra.mxu0 0.0
      %1835 = vmatprep.subr.mxu0 0.0
      %1836 = vmatpush1.xpose.msra.mxu0 0.0
      %1837 = vmatprep.subr.mxu0 0.0
      %1838 = vmatpush1.xpose.msra.mxu0 0.0
      %1839 = vmatprep.subr.mxu0 0.0
      %1840 = vmatpush1.xpose.msra.mxu0 0.0
      %1841 = vmatprep.subr.mxu0 0.0
      %1842 = vmatpush1.xpose.msra.mxu0 0.0
      %1843 = vmatprep.subr.mxu0 0.0
      %1844 = vmatpush1.xpose.msra.mxu0 0.0
      %1845 = vmatprep.subr.mxu0 0.0
      %1846 = vmatpush1.xpose.msra.mxu0 0.0
      %1847 = vmatprep.subr.mxu0 0.0
      %1848 = vmatpush1.xpose.msra.mxu0 0.0
      %1849 = vmatprep.subr.mxu0 0.0
      %1850 = vmatpush1.xpose.msra.mxu0 0.0
      %1851 = vmatprep.subr.mxu0 0.0
      %1852 = vmatpush1.xpose.msra.mxu0 0.0
      %1853 = vmatprep.subr.mxu0 0.0
      %1854 = vmatpush1.xpose.msra.mxu0 0.0
      %1855 = vmatprep.subr.mxu0 0.0
      %1856 = vmatpush1.xpose.msra.mxu0 0.0
      %1857 = vmatprep.subr.mxu0 0.0
      %1858 = vmatpush1.xpose.msra.mxu0 0.0
      %1859 = vmatprep.subr.mxu0 0.0
      %1860 = vmatpush1.xpose.msra.mxu0 0.0
      %1861 = vmatprep.subr.mxu0 0.0
      %1862 = vmatpush1.xpose.msra.mxu0 0.0
      %1863 = vmatprep.subr.mxu0 0.0
      %1864 = vmatpush1.xpose.msra.mxu0 0.0
      %1865 = vmatprep.subr.mxu0 0.0
      %1866 = vmatpush1.xpose.msra.mxu0 0.0
      %1867 = vmatprep.subr.mxu0 0.0
      %1868 = vmatpush1.xpose.msra.mxu0 0.0
      %1869 = vmatprep.subr.mxu0 0.0
      %1870 = vmatpush1.xpose.msra.mxu0 0.0
      %1871 = vmatprep.subr.mxu0 0.0
      %1872 = vmatpush1.xpose.msra.mxu0 0.0
      %1873 = vmatprep.subr.mxu0 0.0
      %1874 = vmatpush1.xpose.msra.mxu0 0.0
      %1875 = vmatprep.subr.mxu0 0.0
      %1876 = vmatpush1.xpose.msra.mxu0 0.0
      %1877 = vmatprep.subr.mxu0 0.0
      %1878 = vmatpush1.xpose.msra.mxu0 0.0
      %1879 = vmatprep.subr.mxu0 0.0
      %1880 = vmatpush1.xpose.msra.mxu0 0.0
      %1881 = vmatprep.subr.mxu0 0.0
      %1882 = vmatpush1.xpose.msra.mxu0 0.0
      %1883 = vmatprep.subr.mxu0 0.0
      %1884 = vmatpush1.xpose.msra.mxu0 0.0
      %1885 = vmatprep.subr.mxu0 0.0
      %1886 = vmatpush1.xpose.msra.mxu0 0.0
      %1887 = vmatprep.subr.mxu0 0.0
      %1888 = vmatpush1.xpose.msra.mxu0 0.0
      %1889 = vmatprep.subr.mxu0 0.0
      %1890 = vmatpush1.xpose.msra.mxu0 0.0
      %1891 = vmatprep.mubr.f32.mxu0 %v1819
      %1892 = vmatmul.mubr.f32.gmra.mrb[0].mxu0 %v1813
      %v1893 = vpop.f32.mrb[0].mxu0
      %v1894 = vadd.f32 %v271, %v1893
      %v1895 = vpop.f32.mrb[0].mxu0
      %1896 = vmatprep.mubr.f32.mxu0 %v1822
      %1897 = vmatmul.mubr.f32.gmra.mrb[0].mxu0 %v1815
      %v1898 = vpop.f32.mrb[0].mxu0
      %v1899 = vadd.f32 %v271, %v1898
      %v1900 = vpop.f32.mrb[0].mxu0
      %1901 = vdwg.mxu0
      %vm1902 = vcmask 64512
      %v1903 = vsel %vm1902, %v1894, -inf
      %1904 = vmax.xlane.f32.xlu0 %v1903
      %v1905 = vpop.xlane.xlu0 %1904
      %v1906 = vsel %vm1902, %v1899, -inf
      %1907 = vmax.xlane.f32.xlu0 %v1906
      %v1908 = vpop.xlane.xlu0 %1907
      %v1909 = vsub.f32 %v1894, %v1905
      %v1910 = vsub.f32 %v1899, %v1908
      %v1911 = vmul.f32 %v1909, 1.442695
      %v1912 = vpow.pop %v1911
      %v1913 = vmul.f32 %v1910, 1.442695
      %v1914 = vpow.pop %v1913
      %v1915 = vsel %vm1902, %v1912, 0.0
      %1916 = vadd.xlane.f32.xlu0 %v1915
      %v1917 = vpop.xlane.xlu0 %1916
      %v1918 = vsel %vm1902, %v1914, 0.0
      %1919 = vadd.xlane.f32.xlu0 %v1918
      %v1920 = vpop.xlane.xlu0 %1919
      %v1921 = vrcp.pop %v1917
      %v1922 = vmul.f32 %v1912, %v1921
      %v1923 = vrcp.pop %v1920
      %v1924 = vmul.f32 %v1914, %v1923
      %1925 = vst.msk [vmem:[%s224] sm:$0xff] %vm1902, %v1922
      %1926 = vst.msk [vmem:[%s224 + $0x8] sm:$0xff] %vm1902, %v1924
      %s1927 = smul.u32 2, %s16
      %p1928 = scmp.lt.s32.totalorder %s1927, 3
      %s1929 = scalar_select %p1928, %s1927, 3
      %s1930 = smul.addr %s1929, 8
      %s1931 = scalar_lea.vmem %s5, %s1930
      // Predicated region
      $region41: #{gcn_forward.1} parent=39 // pred_check
        %p1932 = pneg %p144
      $region42: #{gcn_forward.1} parent=39 // pred_check_branch
        %1934 = sbr.rel (%p1932) target = $region44
      $region43: #{gcn_forward.1} parent=39 // pred_region
        %s1935 = smul.u32 2, %s16
      $region44: #{gcn_forward.1} parent=39 // pred_fallthru
        _
    $region40: #{gcn_forward.1} parent=5 // pred_fallthru
      _
    %p1936 = scmp.le.s32.totalorder 2, %s11
    // Predicated region
    $region45: #{gcn_forward.1} parent=5 // pred_check
      %p1937 = pneg %p1936
    $region46: #{gcn_forward.1} parent=5 // pred_check_branch
      %1939 = sbr.rel (%p1937) target = $region48
    $region47: #{gcn_forward.1} parent=5 // pred_region
      %s1940 = ssub.s32 %s11, 2
      // Predicated region
      $region49: #{gcn_forward.1} parent=47 // pred_check
        %p1941 = pneg %p150
      $region50: #{gcn_forward.1} parent=47 // pred_check_branch
        %1943 = sbr.rel (%p1941) target = $region52
      $region51: #{gcn_forward.1} parent=47 // pred_region
        %s1944 = smul.u32 2, %s17
        %p1945 = scmp.lt.s32.totalorder %s1944, 3
        %s1946 = scalar_select %p1945, %s1944, 3
        %s1947 = smul.addr %s1946, 8
        %s1948 = scalar_lea.vmem %s5, %s1947
      $region52: #{gcn_forward.1} parent=47 // pred_fallthru
        _
    $region48: #{gcn_forward.1} parent=5 // pred_fallthru
      _
  $region6: #{gcn_forward.1} parent=0 // loop_footer
    %s15 = sadd.s32 1, %s11
  $region7: #{gcn_forward.1} parent=0 // loop_footer_branch
    %10 = sbr.rel target = $region3
  $region8: #{gcn_forward.1} parent=0 // loop_exit
    _

</llo_original>
